<compile_context>
chip_gen: v5e
topology: v5e:2x2
jax: 0.10.0
libtpu: 0.0.40
codegen_flags: <defaults>
</compile_context>

<pallas_src>
import functools

import jax
import jax.numpy as jnp
from jax import lax
from jax.experimental import pallas as pl
from jax.experimental.pallas import tpu as pltpu


def _round_up(v, m):
    return ((v + m - 1) // m) * m


def _conv_branch(x_ref, w_ref, *, kh, kw, dil, rows_out, w_out, c, pack, acc_ref):
    """Conv of one halo'd row band against tap-packed weights.

    x_ref : (1, rows_out + dil*(kh-1), w_out + dil*(kw-1), c)  VMEM block
    w_ref : (kh*kw*c, cp)                                       VMEM block (K packed as (ki,kj,ci))
    Returns an f32 (rows_out * w_out, cp) result.
    """
    if pack:
        # Small-channel path: pack all KH*KW taps along K and issue ONE MXU dot with
        # K = kh*kw*c (instead of kh*kw dots with K = c that underfill the MXU and need
        # kh*kw-1 f32 VPU accumulate adds).
        taps = []
        for ki in range(kh):
            for kj in range(kw):
                taps.append(x_ref[0, ki * dil:ki * dil + rows_out,
                                  kj * dil:kj * dil + w_out, :])
        patch = jnp.concatenate(taps, axis=-1)                    # (rows_out, w_out, kh*kw*c)
        patch = patch.reshape(rows_out * w_out, kh * kw * c)
        return jnp.dot(patch, w_ref[...], preferred_element_type=jnp.float32)

    # Large-channel path: K = c already fills the MXU.  The kj (W-axis) shift is hoisted
    # (one W-shifted slab + one 2-D reshape per kj); the ki shift is then a free,
    # sublane-aligned row-offset slice of the flattened slab.  Accumulate into a VMEM
    # scratch ref to bound live ranges (and let v7x chain accumulation in the MRB).
    acc_ref[...] = jnp.zeros_like(acc_ref)
    for kj in range(kw):
        slab = x_ref[0, :, kj * dil:kj * dil + w_out, :]          # (rows_in, w_out, c)
        slab = slab.reshape(-1, c)                                # (rows_in*w_out, c)
        for ki in range(kh):
            off = ki * dil * w_out
            acc_ref[...] += jnp.dot(
                slab[off:off + rows_out * w_out],
                w_ref[(ki * kw + kj) * c:(ki * kw + kj + 1) * c, :],
                preferred_element_type=jnp.float32)
    return acc_ref[...]


def _oct_conv_kernel(xh_ref, xl_ref, wh_ref, wl_ref, b_ref, out_ref, *scratch,
                     kh, kw, dil, band_lo, wo, wlo, ch, cl, cp, pack_h, pack_l):
    band_h = 2 * band_lo
    si = 0
    acc_h_ref = None
    if not pack_h:
        acc_h_ref = scratch[si]; si += 1
    acc_l_ref = None
    if not pack_l:
        acc_l_ref = scratch[si]; si += 1

    # High-frequency branch at full resolution, low-frequency branch at LOW resolution.
    acc_h = _conv_branch(xh_ref, wh_ref, kh=kh, kw=kw, dil=dil, rows_out=band_h,
                         w_out=wo, c=ch, pack=pack_h, acc_ref=acc_h_ref)
    acc_l = _conv_branch(xl_ref, wl_ref, kh=kh, kw=kw, dil=dil, rows_out=band_lo,
                         w_out=wlo, c=cl, pack=pack_l, acc_ref=acc_l_ref)

    # Fused epilogue: nearest-x2 upsample of the low-res band + add + bias, emitted as a
    # single full-res output band (no separate low-res HBM writeback / re-read).
    hi = acc_h.reshape(band_lo, 2, wo, cp)                        # free renumber when wo % 8 == 0
    lo = acc_l.reshape(band_lo, wlo, cp)
    lo = jnp.broadcast_to(lo[:, :, None, :],                      # W-repeat x2
                          (band_lo, wlo, 2, cp)).reshape(band_lo, wo, cp)
    out = hi + lo[:, None, :, :] + b_ref[...]                     # H-repeat via broadcast; +2*bias
    out_ref[0] = out.reshape(band_h, wo, cp).astype(out_ref.dtype)


def _avgpool2(x):
    """nn.AvgPool2d(kernel_size=(2,2), stride=2) on NCHW."""
    n, c, h, w = x.shape
    return x.reshape(n, c, h // 2, 2, w // 2, 2).mean(axis=(3, 5))


def _vmem_estimate_bytes(band_lo, *, halo, wp, wlp, ch, cl, wo, wlo, kh, kw, cp, isz):
    band_h = 2 * band_lo
    rows_h, rows_l = band_h * wo, band_lo * wlo
    in_b = 2 * ((band_h + halo) * wp * ch + (band_lo + halo) * wlp * cl) * isz   # double-buffered
    out_b = 2 * band_h * wo * cp * isz                                           # double-buffered
    w_b = 2 * kh * kw * (ch + cl) * cp * isz + 2 * cp * 4
    acc_b = (rows_h + rows_l) * cp * 4                      # f32 dot results / accumulators
    patch_b = (rows_h * ch + rows_l * cl) * kh * kw * isz   # packed im2col patches
    epi_b = 3 * rows_h * cp * 4                             # epilogue temporaries
    return in_b + out_b + w_b + acc_b + patch_b + epi_b


def _pick_band_rows(hlo, est_fn, budget, max_high_rows=512):
    best = 1
    for d in range(1, hlo + 1):
        if hlo % d:
            continue
        if est_fn(d) > budget:
            break
        best = d
        if 2 * d >= max_high_rows:
            break
    return best


def last_octave_conv(x_h, x_l, weights, bias, *, in_channels, out_channels,
                     kernel_size=(3, 3), alpha_in=0.5, alpha_out=0.0,
                     stride=1, padding=1, dilation=1, groups=1,
                     band_rows_low=None, mxu_dtype=None,
                     vmem_budget_bytes=40 << 20):
    assert groups == 1  # TODO(synk): grouped conv (groups > 1) not implemented
    if stride == 2:
        x_h, x_l = _avgpool2(x_h), _avgpool2(x_l)

    kh, kw = kernel_size
    end_h_x = int(in_channels * (1 - alpha_in))     # same rounding as the torch module
    end_h_y = int(out_channels * (1 - alpha_out))
    # NOTE: for alpha_out > 0 the torch forward still only uses weights[:end_h_y] and
    # returns a single end_h_y-channel tensor; that is exactly what is reproduced here.
    ch, cl = end_h_x, in_channels - end_h_x

    # Lane-dense Cout only when padding costs <= 2x output writeback; otherwise accept
    # masked stores (e.g. Cout=4 would otherwise be 32x HBM amplification).
    cp = _round_up(end_h_y, 128)
    if cp > 2 * end_h_y:
        cp = end_h_y

    out_dtype = x_h.dtype
    # For f32 models on v6e/v7x, pass mxu_dtype=jnp.bfloat16 to feed the MXU bf16
    # (accumulation stays f32).  Left None here so the demo matches an f32 reference.
    cdt = jnp.dtype(mxu_dtype) if mxu_dtype is not None else jnp.dtype(out_dtype)
    isz = cdt.itemsize

    n, _, h, w = x_h.shape
    _, _, hl, wl = x_l.shape
    ho = h + 2 * padding - dilation * (kh - 1)
    wo = w + 2 * padding - dilation * (kw - 1)
    hlo = hl + 2 * padding - dilation * (kh - 1)
    wlo = wl + 2 * padding - dilation * (kw - 1)
    assert ho == 2 * hlo and wo == 2 * wlo, "octave add requires a 2x spatial ratio"

    halo = dilation * (kh - 1)
    wp, wlp = w + 2 * padding, wl + 2 * padding

    est = functools.partial(_vmem_estimate_bytes, halo=halo, wp=wp, wlp=wlp, ch=ch,
                            cl=cl, wo=wo, wlo=wlo, kh=kh, kw=kw, cp=cp, isz=isz)
    if band_rows_low is None:
        band_lo = _pick_band_rows(hlo, est, vmem_budget_bytes)
    else:
        band_lo = band_rows_low
        assert hlo % band_lo == 0, (hlo, band_lo)
    nb = hlo // band_lo
    band_h = 2 * band_lo

    # ---- operand prep (wrapper-side XLA) -------------------------------------------
    def prep_w(wpart):          # (end_h_y, c, kh, kw) -> (kh*kw*c, cp), K packed as (ki,kj,ci)
        c = wpart.shape[1]
        wpart = jnp.transpose(wpart.astype(cdt), (2, 3, 1, 0))
        wpart = wpart.reshape(kh * kw * c, end_h_y)
        return jnp.pad(wpart, ((0, 0), (0, cp - end_h_y)))

    w_hh = prep_w(weights[:end_h_y, :end_h_x])
    w_lh = prep_w(weights[:end_h_y, end_h_x:])
    # F.conv2d adds the bias in *each* branch -> the fused (high + up(low)) output carries 2x bias.
    b2 = jnp.pad(2.0 * bias[:end_h_y].astype(jnp.float32), (0, cp - end_h_y)).reshape(1, cp)

    def prep_x(x):              # NCHW -> NHWC (channels on lanes) + spatial halo pad
        x = jnp.transpose(x.astype(cdt), (0, 2, 3, 1))
        return jnp.pad(x, ((0, 0), (padding, padding), (padding, padding), (0, 0)))

    xh = prep_x(x_h)            # (N, H + 2p,  W + 2p,  Ch)
    xl = prep_x(x_l)            # (N, Hl + 2p, Wl + 2p, Cl)

    # Halo'd row bands: band b of image i covers low-res output rows [b*band_lo, (b+1)*band_lo)
    # and high-res output rows [b*band_h, (b+1)*band_h).
    # TODO(synk): pl.Element-indexed overlapping input windows (or a manual-DMA inner pipeline)
    # would avoid materializing this halo'd band copy in HBM; skipped for robustness.
    def band_stack(x, rows, step):
        if nb == 1:
            return x
        slabs = [x[:, b * step:b * step + rows] for b in range(nb)]
        return jnp.stack(slabs, axis=1).reshape(x.shape[0] * nb, rows,
                                                x.shape[2], x.shape[3])

    xh_b = band_stack(xh, band_h + halo, band_h)     # (N*nb, band_h+halo,  W+2p,  Ch)
    xl_b = band_stack(xl, band_lo + halo, band_lo)   # (N*nb, band_lo+halo, Wl+2p, Cl)

    pack_h, pack_l = ch < 128, cl < 128
    scratch_shapes = []
    if not pack_h:
        scratch_shapes.append(pltpu.VMEM((band_h * wo, cp), jnp.float32))
    if not pack_l:
        scratch_shapes.append(pltpu.VMEM((band_lo * wlo, cp), jnp.float32))

    kern = functools.partial(_oct_conv_kernel, kh=kh, kw=kw, dil=dilation,
                             band_lo=band_lo, wo=wo, wlo=wlo, ch=ch, cl=cl, cp=cp,
                             pack_h=pack_h, pack_l=pack_l)

    # Scoped VMEM sized from the actual blocks/temporaries (default 16/32 MiB is too
    # small for big bands; clamp below v7x's 64 MiB physical VMEM).
    vmem_limit = int(min(max(2 * est(band_lo), 32 << 20), 60 << 20))

    out = pl.pallas_call(
        kern,
        out_shape=jax.ShapeDtypeStruct((n, ho, wo, cp), out_dtype),
        grid_spec=pltpu.PrefetchScalarGridSpec(
            num_scalar_prefetch=0,
            grid=(n, nb),
            in_specs=[
                pl.BlockSpec((1, band_h + halo, wp, ch),
                             lambda i, b: (i * nb + b, 0, 0, 0)),
                pl.BlockSpec((1, band_lo + halo, wlp, cl),
                             lambda i, b: (i * nb + b, 0, 0, 0)),
                # Grid-invariant (constant index_map) operands stay resident in VMEM.
                # TODO(synk): pipeline_mode=pl.Buffered(1) would also drop their second
                # buffer for extra headroom on v7x's 64 MiB VMEM.
                pl.BlockSpec((kh * kw * ch, cp), lambda i, b: (0, 0)),
                pl.BlockSpec((kh * kw * cl, cp), lambda i, b: (0, 0)),
                pl.BlockSpec((1, cp), lambda i, b: (0, 0)),
            ],
            out_specs=pl.BlockSpec((1, band_h, wo, cp), lambda i, b: (i, b, 0, 0)),
            scratch_shapes=scratch_shapes,
        ),
        compiler_params=pltpu.CompilerParams(
            dimension_semantics=("parallel", "parallel"),   # batch + band shard across TCs (v7x)
            vmem_limit_bytes=vmem_limit),
    )(xh_b, xl_b, w_hh, w_lh, b2)

    out = out[..., :end_h_y]                 # drop Cout padding (no-op when cp == end_h_y)
    return jnp.transpose(out, (0, 3, 1, 2))  # NHWC -> NCHW


if __name__ == "__main__":
    key = jax.random.PRNGKey(0)
    k1, k2, k3, k4 = jax.random.split(key, 4)

    N, Cin, Cout, H = 2, 4, 4, 16
    alpha_in, alpha_out = 0.5, 0.0
    ch = int(Cin * (1 - alpha_in))          # high-frequency input channels
    cl = Cin - ch                           # low-frequency input channels

    x_h = jax.random.normal(k1, (N, ch, H, H), dtype=jnp.float32)
    x_l = jax.random.normal(k2, (N, cl, H // 2, H // 2), dtype=jnp.float32)
    weights = 0.1 * jax.random.normal(k3, (Cout, Cin, 3, 3), dtype=jnp.float32)
    bias = 0.1 * jax.random.normal(k4, (Cout,), dtype=jnp.float32)

    # band_rows_low=4 -> 2 row bands per image, exercising the halo'd band-tiling path.
    out = last_octave_conv(x_h, x_l, weights, bias,
                           in_channels=Cin, out_channels=Cout,
                           kernel_size=(3, 3), alpha_in=alpha_in,
                           alpha_out=alpha_out, stride=1, padding=1,
                           dilation=1, groups=1, band_rows_low=4)
    out = jax.block_until_ready(out)

    # pure-JAX reference matching the torch forward:
    #   F.conv2d(X_h, W_h, bias) + upsample_nearest(F.conv2d(X_l, W_l, bias), 2)
    end_h_x, end_h_y = ch, Cout

    def ref_conv(x, wgt):
        return lax.conv_general_dilated(
            x, wgt, window_strides=(1, 1), padding=[(1, 1), (1, 1)],
            dimension_numbers=("NCHW", "OIHW", "NCHW"))

    bcol = bias.reshape(1, -1, 1, 1)
    r_h2h = ref_conv(x_h, weights[:end_h_y, :end_h_x]) + bcol
    r_l2h = ref_conv(x_l, weights[:end_h_y, end_h_x:]) + bcol
    r_l2h = jnp.repeat(jnp.repeat(r_l2h, 2, axis=2), 2, axis=3)
    ref = r_h2h + r_l2h

    assert out.shape == ref.shape, (out.shape, ref.shape)
    err = float(jnp.max(jnp.abs(out - ref)))
    assert jnp.allclose(out, ref, atol=1e-4, rtol=1e-4), err
    print("KERNEL_OK")
</pallas_src>

<mosaic_0001>
module attributes {stable_mosaic.version = 11 : i64} {
  func.func @_oct_conv_kernel(%arg0: i32, %arg1: i32, %arg2: memref<1x10x18x2xf32, #tpu.memory_space<vmem>>, %arg3: memref<1x6x10x2xf32, #tpu.memory_space<vmem>>, %arg4: memref<18x4xf32, #tpu.memory_space<vmem>>, %arg5: memref<18x4xf32, #tpu.memory_space<vmem>>, %arg6: memref<1x4xf32, #tpu.memory_space<vmem>>, %arg7: memref<1x8x16x4xf32, #tpu.memory_space<vmem>>) attributes {dimension_semantics = [#tpu.dimension_semantics<parallel>, #tpu.dimension_semantics<parallel>], iteration_bounds = array<i64: 2, 2>, scalar_prefetch = 0 : i64, scratch_operands = 0 : i64, tpu.core_type = #tpu.core_type<tc>, window_params = [{transform_indices = @transform_0, window_bounds = array<i64: 1, 10, 18, 2>}, {transform_indices = @transform_1, window_bounds = array<i64: 1, 6, 10, 2>}, {pipeline_mode = #tpu.pipeline_mode<synchronous>, transform_indices = @transform_2, window_bounds = array<i64: 18, 4>}, {pipeline_mode = #tpu.pipeline_mode<synchronous>, transform_indices = @transform_3, window_bounds = array<i64: 18, 4>}, {pipeline_mode = #tpu.pipeline_mode<synchronous>, transform_indices = @transform_4, window_bounds = array<i64: 1, 4>}, {transform_indices = @transform_5, window_bounds = array<i64: 1, 8, 16, 4>}]} {
    %c0 = arith.constant 0 : index
    %c0_0 = arith.constant 0 : index
    %c0_1 = arith.constant 0 : index
    %c0_2 = arith.constant 0 : index
    %0 = vector.load %arg2[%c0, %c0_0, %c0_1, %c0_2] : memref<1x10x18x2xf32, #tpu.memory_space<vmem>>, vector<1x8x16x2xf32>
    %1 = vector.shape_cast %0 : vector<1x8x16x2xf32> to vector<8x16x2xf32>
    %c0_3 = arith.constant 0 : index
    %c0_4 = arith.constant 0 : index
    %c1 = arith.constant 1 : index
    %c0_5 = arith.constant 0 : index
    %2 = vector.load %arg2[%c0_3, %c0_4, %c1, %c0_5] : memref<1x10x18x2xf32, #tpu.memory_space<vmem>>, vector<1x8x16x2xf32>
    %3 = vector.shape_cast %2 : vector<1x8x16x2xf32> to vector<8x16x2xf32>
    %c0_6 = arith.constant 0 : index
    %c0_7 = arith.constant 0 : index
    %c2 = arith.constant 2 : index
    %c0_8 = arith.constant 0 : index
    %4 = vector.load %arg2[%c0_6, %c0_7, %c2, %c0_8] : memref<1x10x18x2xf32, #tpu.memory_space<vmem>>, vector<1x8x16x2xf32>
    %5 = vector.shape_cast %4 : vector<1x8x16x2xf32> to vector<8x16x2xf32>
    %c0_9 = arith.constant 0 : index
    %c1_10 = arith.constant 1 : index
    %c0_11 = arith.constant 0 : index
    %c0_12 = arith.constant 0 : index
    %6 = vector.load %arg2[%c0_9, %c1_10, %c0_11, %c0_12] : memref<1x10x18x2xf32, #tpu.memory_space<vmem>>, vector<1x8x16x2xf32>
    %7 = vector.shape_cast %6 : vector<1x8x16x2xf32> to vector<8x16x2xf32>
    %c0_13 = arith.constant 0 : index
    %c1_14 = arith.constant 1 : index
    %c1_15 = arith.constant 1 : index
    %c0_16 = arith.constant 0 : index
    %8 = vector.load %arg2[%c0_13, %c1_14, %c1_15, %c0_16] : memref<1x10x18x2xf32, #tpu.memory_space<vmem>>, vector<1x8x16x2xf32>
    %9 = vector.shape_cast %8 : vector<1x8x16x2xf32> to vector<8x16x2xf32>
    %c0_17 = arith.constant 0 : index
    %c1_18 = arith.constant 1 : index
    %c2_19 = arith.constant 2 : index
    %c0_20 = arith.constant 0 : index
    %10 = vector.load %arg2[%c0_17, %c1_18, %c2_19, %c0_20] : memref<1x10x18x2xf32, #tpu.memory_space<vmem>>, vector<1x8x16x2xf32>
    %11 = vector.shape_cast %10 : vector<1x8x16x2xf32> to vector<8x16x2xf32>
    %c0_21 = arith.constant 0 : index
    %c2_22 = arith.constant 2 : index
    %c0_23 = arith.constant 0 : index
    %c0_24 = arith.constant 0 : index
    %12 = vector.load %arg2[%c0_21, %c2_22, %c0_23, %c0_24] : memref<1x10x18x2xf32, #tpu.memory_space<vmem>>, vector<1x8x16x2xf32>
    %13 = vector.shape_cast %12 : vector<1x8x16x2xf32> to vector<8x16x2xf32>
    %c0_25 = arith.constant 0 : index
    %c2_26 = arith.constant 2 : index
    %c1_27 = arith.constant 1 : index
    %c0_28 = arith.constant 0 : index
    %14 = vector.load %arg2[%c0_25, %c2_26, %c1_27, %c0_28] : memref<1x10x18x2xf32, #tpu.memory_space<vmem>>, vector<1x8x16x2xf32>
    %15 = vector.shape_cast %14 : vector<1x8x16x2xf32> to vector<8x16x2xf32>
    %c0_29 = arith.constant 0 : index
    %c2_30 = arith.constant 2 : index
    %c2_31 = arith.constant 2 : index
    %c0_32 = arith.constant 0 : index
    %16 = vector.load %arg2[%c0_29, %c2_30, %c2_31, %c0_32] : memref<1x10x18x2xf32, #tpu.memory_space<vmem>>, vector<1x8x16x2xf32>
    %17 = vector.shape_cast %16 : vector<1x8x16x2xf32> to vector<8x16x2xf32>
    %18 = tpu.concatenate %1, %3, %5, %7, %9, %11, %13, %15, %17 in 2 : vector<8x16x2xf32>, vector<8x16x2xf32>, vector<8x16x2xf32>, vector<8x16x2xf32>, vector<8x16x2xf32>, vector<8x16x2xf32>, vector<8x16x2xf32>, vector<8x16x2xf32>, vector<8x16x2xf32> -> vector<8x16x18xf32>
    %19 = vector.shape_cast %18 : vector<8x16x18xf32> to vector<128x18xf32>
    %c0_33 = arith.constant 0 : index
    %c0_34 = arith.constant 0 : index
    %20 = vector.load %arg4[%c0_33, %c0_34] : memref<18x4xf32, #tpu.memory_space<vmem>>, vector<18x4xf32>
    %cst = arith.constant dense<0.000000e+00> : vector<128x4xf32>
    %21 = tpu.matmul %19, %20, %cst {dimension_numbers = #tpu.dot_dimension_numbers<[1], [0], [0], [1], [0, 0, 1, 1], [], []>} : vector<128x18xf32>, vector<18x4xf32>, vector<128x4xf32> -> vector<128x4xf32>
    %c0_35 = arith.constant 0 : index
    %c0_36 = arith.constant 0 : index
    %c0_37 = arith.constant 0 : index
    %c0_38 = arith.constant 0 : index
    %22 = vector.load %arg3[%c0_35, %c0_36, %c0_37, %c0_38] : memref<1x6x10x2xf32, #tpu.memory_space<vmem>>, vector<1x4x8x2xf32>
    %23 = vector.shape_cast %22 : vector<1x4x8x2xf32> to vector<4x8x2xf32>
    %c0_39 = arith.constant 0 : index
    %c0_40 = arith.constant 0 : index
    %c1_41 = arith.constant 1 : index
    %c0_42 = arith.constant 0 : index
    %24 = vector.load %arg3[%c0_39, %c0_40, %c1_41, %c0_42] : memref<1x6x10x2xf32, #tpu.memory_space<vmem>>, vector<1x4x8x2xf32>
    %25 = vector.shape_cast %24 : vector<1x4x8x2xf32> to vector<4x8x2xf32>
    %c0_43 = arith.constant 0 : index
    %c0_44 = arith.constant 0 : index
    %c2_45 = arith.constant 2 : index
    %c0_46 = arith.constant 0 : index
    %26 = vector.load %arg3[%c0_43, %c0_44, %c2_45, %c0_46] : memref<1x6x10x2xf32, #tpu.memory_space<vmem>>, vector<1x4x8x2xf32>
    %27 = vector.shape_cast %26 : vector<1x4x8x2xf32> to vector<4x8x2xf32>
    %c0_47 = arith.constant 0 : index
    %c1_48 = arith.constant 1 : index
    %c0_49 = arith.constant 0 : index
    %c0_50 = arith.constant 0 : index
    %28 = vector.load %arg3[%c0_47, %c1_48, %c0_49, %c0_50] : memref<1x6x10x2xf32, #tpu.memory_space<vmem>>, vector<1x4x8x2xf32>
    %29 = vector.shape_cast %28 : vector<1x4x8x2xf32> to vector<4x8x2xf32>
    %c0_51 = arith.constant 0 : index
    %c1_52 = arith.constant 1 : index
    %c1_53 = arith.constant 1 : index
    %c0_54 = arith.constant 0 : index
    %30 = vector.load %arg3[%c0_51, %c1_52, %c1_53, %c0_54] : memref<1x6x10x2xf32, #tpu.memory_space<vmem>>, vector<1x4x8x2xf32>
    %31 = vector.shape_cast %30 : vector<1x4x8x2xf32> to vector<4x8x2xf32>
    %c0_55 = arith.constant 0 : index
    %c1_56 = arith.constant 1 : index
    %c2_57 = arith.constant 2 : index
    %c0_58 = arith.constant 0 : index
    %32 = vector.load %arg3[%c0_55, %c1_56, %c2_57, %c0_58] : memref<1x6x10x2xf32, #tpu.memory_space<vmem>>, vector<1x4x8x2xf32>
    %33 = vector.shape_cast %32 : vector<1x4x8x2xf32> to vector<4x8x2xf32>
    %c0_59 = arith.constant 0 : index
    %c2_60 = arith.constant 2 : index
    %c0_61 = arith.constant 0 : index
    %c0_62 = arith.constant 0 : index
    %34 = vector.load %arg3[%c0_59, %c2_60, %c0_61, %c0_62] : memref<1x6x10x2xf32, #tpu.memory_space<vmem>>, vector<1x4x8x2xf32>
    %35 = vector.shape_cast %34 : vector<1x4x8x2xf32> to vector<4x8x2xf32>
    %c0_63 = arith.constant 0 : index
    %c2_64 = arith.constant 2 : index
    %c1_65 = arith.constant 1 : index
    %c0_66 = arith.constant 0 : index
    %36 = vector.load %arg3[%c0_63, %c2_64, %c1_65, %c0_66] : memref<1x6x10x2xf32, #tpu.memory_space<vmem>>, vector<1x4x8x2xf32>
    %37 = vector.shape_cast %36 : vector<1x4x8x2xf32> to vector<4x8x2xf32>
    %c0_67 = arith.constant 0 : index
    %c2_68 = arith.constant 2 : index
    %c2_69 = arith.constant 2 : index
    %c0_70 = arith.constant 0 : index
    %38 = vector.load %arg3[%c0_67, %c2_68, %c2_69, %c0_70] : memref<1x6x10x2xf32, #tpu.memory_space<vmem>>, vector<1x4x8x2xf32>
    %39 = vector.shape_cast %38 : vector<1x4x8x2xf32> to vector<4x8x2xf32>
    %40 = tpu.concatenate %23, %25, %27, %29, %31, %33, %35, %37, %39 in 2 : vector<4x8x2xf32>, vector<4x8x2xf32>, vector<4x8x2xf32>, vector<4x8x2xf32>, vector<4x8x2xf32>, vector<4x8x2xf32>, vector<4x8x2xf32>, vector<4x8x2xf32>, vector<4x8x2xf32> -> vector<4x8x18xf32>
    %41 = vector.shape_cast %40 : vector<4x8x18xf32> to vector<32x18xf32>
    %c0_71 = arith.constant 0 : index
    %c0_72 = arith.constant 0 : index
    %42 = vector.load %arg5[%c0_71, %c0_72] : memref<18x4xf32, #tpu.memory_space<vmem>>, vector<18x4xf32>
    %cst_73 = arith.constant dense<0.000000e+00> : vector<32x4xf32>
    %43 = tpu.matmul %41, %42, %cst_73 {dimension_numbers = #tpu.dot_dimension_numbers<[1], [0], [0], [1], [0, 0, 1, 1], [], []>} : vector<32x18xf32>, vector<18x4xf32>, vector<32x4xf32> -> vector<32x4xf32>
    %44 = vector.shape_cast %21 : vector<128x4xf32> to vector<4x2x16x4xf32>
    %45 = vector.shape_cast %43 : vector<32x4xf32> to vector<4x8x4xf32>
    %46 = vector.shape_cast %45 : vector<4x8x4xf32> to vector<4x8x1x4xf32>
    %47 = vector.shape_cast %46 : vector<4x8x1x4xf32> to vector<4x8x1x4xf32>
    %48 = vector.broadcast %47 : vector<4x8x1x4xf32> to vector<4x8x2x4xf32>
    %49 = vector.shape_cast %48 : vector<4x8x2x4xf32> to vector<4x16x4xf32>
    %50 = vector.shape_cast %49 : vector<4x16x4xf32> to vector<4x1x16x4xf32>
    %51 = vector.broadcast %50 : vector<4x1x16x4xf32> to vector<4x2x16x4xf32>
    %52 = arith.addf %44, %51 : vector<4x2x16x4xf32>
    %c0_74 = arith.constant 0 : index
    %c0_75 = arith.constant 0 : index
    %53 = vector.load %arg6[%c0_74, %c0_75] : memref<1x4xf32, #tpu.memory_space<vmem>>, vector<1x4xf32>
    %54 = vector.shape_cast %53 : vector<1x4xf32> to vector<1x1x1x4xf32>
    %55 = vector.broadcast %54 : vector<1x1x1x4xf32> to vector<4x2x16x4xf32>
    %56 = arith.addf %52, %55 : vector<4x2x16x4xf32>
    %57 = vector.shape_cast %56 : vector<4x2x16x4xf32> to vector<8x16x4xf32>
    %c0_76 = arith.constant 0 : index
    %c0_77 = arith.constant 0 : index
    %c0_78 = arith.constant 0 : index
    %c0_79 = arith.constant 0 : index
    %58 = vector.load %arg7[%c0_76, %c0_77, %c0_78, %c0_79] : memref<1x8x16x4xf32, #tpu.memory_space<vmem>>, vector<1x8x16x4xf32>
    %59 = vector.shape_cast %58 : vector<1x8x16x4xf32> to vector<8x16x4xf32>
    %60 = vector.shape_cast %57 : vector<8x16x4xf32> to vector<1x8x16x4xf32>
    tpu.vector_store %arg7[%c0_76, %c0_77, %c0_78, %c0_79], %60 {strides = array<i32>} : memref<1x8x16x4xf32, #tpu.memory_space<vmem>>, vector<1x8x16x4xf32>,
    return
  }
  func.func @transform_0(%arg0: i32, %arg1: i32) -> (i32, i32, i32, i32) {
    %c2_i32 = arith.constant 2 : i32
    %0 = arith.muli %arg0, %c2_i32 : i32
    %1 = arith.addi %0, %arg1 : i32
    %c0_i32 = arith.constant 0 : i32
    %c0_i32_0 = arith.constant 0 : i32
    %c0_i32_1 = arith.constant 0 : i32
    %c0_i32_2 = arith.constant 0 : i32
    return %1, %c0_i32, %c0_i32_0, %c0_i32_1 : i32, i32, i32, i32
  }
  func.func @transform_1(%arg0: i32, %arg1: i32) -> (i32, i32, i32, i32) {
    %c2_i32 = arith.constant 2 : i32
    %0 = arith.muli %arg0, %c2_i32 : i32
    %1 = arith.addi %0, %arg1 : i32
    %c0_i32 = arith.constant 0 : i32
    %c0_i32_0 = arith.constant 0 : i32
    %c0_i32_1 = arith.constant 0 : i32
    %c0_i32_2 = arith.constant 0 : i32
    return %1, %c0_i32, %c0_i32_0, %c0_i32_1 : i32, i32, i32, i32
  }
  func.func @transform_2(%arg0: i32, %arg1: i32) -> (i32, i32) {
    %c0_i32 = arith.constant 0 : i32
    %c0_i32_0 = arith.constant 0 : i32
    %c0_i32_1 = arith.constant 0 : i32
    return %c0_i32, %c0_i32_0 : i32, i32
  }
  func.func @transform_3(%arg0: i32, %arg1: i32) -> (i32, i32) {
    %c0_i32 = arith.constant 0 : i32
    %c0_i32_0 = arith.constant 0 : i32
    %c0_i32_1 = arith.constant 0 : i32
    return %c0_i32, %c0_i32_0 : i32, i32
  }
  func.func @transform_4(%arg0: i32, %arg1: i32) -> (i32, i32) {
    %c0_i32 = arith.constant 0 : i32
    %c0_i32_0 = arith.constant 0 : i32
    %c0_i32_1 = arith.constant 0 : i32
    return %c0_i32, %c0_i32_0 : i32, i32
  }
  func.func @transform_5(%arg0: i32, %arg1: i32) -> (i32, i32, i32, i32) {
    %c0_i32 = arith.constant 0 : i32
    %c0_i32_0 = arith.constant 0 : i32
    %c0_i32_1 = arith.constant 0 : i32
    return %arg0, %arg1, %c0_i32, %c0_i32_0 : i32, i32, i32, i32
  }
}

</mosaic_0001>

<llo_original>
// kernel: tpu_custom_call.1
$region0: #{tpu_custom_call.1}
  #allocation0 [shape = 'u32[]', space=smem, size = 0x4, offset = 0x4, fixed_abs, tag = 'smem constant byte address 0x4 - core index']
  #allocation1 [shape = 'u32[72,128]{1,0:T(1,128)}', space=vmem, size = 0x9000, scoped, tag = 'internal scratch']
  %s0 = inlined_call_operand.vmem [shape: f32[4,10,18,2], index: 0, kind: input, shape index: {}]
  %s1 = inlined_call_operand.vmem [shape: f32[4,6,10,2], index: 1, kind: input, shape index: {}]
  %s2 = inlined_call_operand.vmem [shape: f32[18,4], index: 2, kind: input, shape index: {}]
  %s3 = inlined_call_operand.vmem [shape: f32[18,4], index: 3, kind: input, shape index: {}]
  %s4 = inlined_call_operand.vmem [shape: f32[1,4], index: 4, kind: input, shape index: {}]
  %s5 = inlined_call_operand.vmem [shape: f32[2,16,16,4], index: 5, kind: output, shape index: {}]
  %s6 = sld [smem:[#allocation0]]
  $region53: #{tpu_custom_call.1} parent=0
    _
  %s8 = ssub.s32 1, %s6
  %s9 = scalar_select 0, %s8, %s6
  loop: start=0, step=1, limit=6
  $region2: #{tpu_custom_call.1} parent=0 // loop_pre_header
    _
  $region3: #{tpu_custom_call.1} parent=0 // loop_header
    %s11 = sphi 0, %s15
    %p12 = scmp.ge.s32.totalorder %s11, 6
    %s18 = sphi 0, %s30
    %s19 = sphi 0, %s26
    %s20 = sphi 0, %s18
    %s21 = sphi 0, %s19
    %s22 = sphi 0, %s20
    %s23 = sphi 0, %s21
    %s37 = sphi 0, %s39
    %s40 = sphi 0, %s37
    %s41 = sphi 0, %s40
    %s57 = sphi 0, %s41
    %s67 = sphi 0, %s69
    %s70 = sphi 0, %s67
    %s71 = sphi 0, %s70
    %s87 = sphi 0, %s71
    %s91 = sphi 0, %s91
    %s93 = sphi 0, %s91
    %s94 = sphi 0, %s93
    %s108 = sphi 0, %s94
    %s112 = sphi 0, %s112
    %s114 = sphi 0, %s112
    %s115 = sphi 0, %s114
    %s129 = sphi 0, %s115
    %s133 = sphi 0, %s133
    %s135 = sphi 0, %s133
    %s136 = sphi 0, %s135
    %s150 = sphi 0, %s136
    %s158 = sphi 0, %s160
    %s161 = sphi 0, %s158
    %s162 = sphi 0, %s161
    %s178 = sphi 0, %s162
  $region4: #{tpu_custom_call.1} parent=0 // loop_header_branch
    %14 = sbr.rel (%p12) target = $region8
  $region5: #{tpu_custom_call.1} parent=0 // loop_body
    %s16 = ssub.s32 %s11, 1
    %s17 = ssub.s32 %s11, 2
    %s24 = sadd.s32 1, %s19
    %p25 = scmp.ge.s32.totalorder %s24, 2
    %s26 = scalar_select %p25, 0, %s24
    %s27 = sadd.s32 1, %s18
    %s28 = scalar_select %p25, %s27, %s18
    %p29 = scmp.ge.s32.totalorder %s28, 2
    %s30 = scalar_select %p29, 0, %s28
    %s31 = smul.u32 %s18, 2
    %s32 = sadd.s32 %s31, %s19
    %s33 = smul.u32 %s30, 2
    %s34 = sadd.s32 %s33, %s26
    %s35 = ssub.s32 %s32, %s34
    %p36 = scmp.eq.s32.totalorder %s35, 0
    %s38 = sadd.s32 %s37, 1
    %s39 = scalar_select %p36, %s37, %s38
    %p42 = pneg %p36
    %p43 = scmp.eq.s32.totalorder %s11, 3
    %p44 = por %p42, %p43
    %p45 = scmp.ne.s32.totalorder %s37, %s40
    %p46 = scmp.eq.s32.totalorder %s11, 0
    %p47 = por %p45, %p46
    %p48 = scmp.ne.s32.totalorder %s37, %s40
    %p49 = scmp.eq.s32.totalorder %s16, 3
    %p50 = por %p48, %p49
    %p51 = scmp.ne.s32.totalorder %s40, %s41
    %p52 = scmp.eq.s32.totalorder %s16, 0
    %p53 = por %p51, %p52
    %p54 = scmp.ne.s32.totalorder %s40, %s41
    %p55 = scmp.eq.s32.totalorder %s17, 3
    %p56 = por %p54, %p55
    %p58 = scmp.ne.s32.totalorder %s41, %s57
    %p59 = scmp.eq.s32.totalorder %s17, 0
    %p60 = por %p58, %p59
    %s61 = smul.u32 %s18, 2
    %s62 = sadd.s32 %s61, %s19
    %s63 = smul.u32 %s30, 2
    %s64 = sadd.s32 %s63, %s26
    %s65 = ssub.s32 %s62, %s64
    %p66 = scmp.eq.s32.totalorder %s65, 0
    %s68 = sadd.s32 %s67, 1
    %s69 = scalar_select %p66, %s67, %s68
    %p72 = pneg %p66
    %p73 = scmp.eq.s32.totalorder %s11, 3
    %p74 = por %p72, %p73
    %p75 = scmp.ne.s32.totalorder %s67, %s70
    %p76 = scmp.eq.s32.totalorder %s11, 0
    %p77 = por %p75, %p76
    %p78 = scmp.ne.s32.totalorder %s67, %s70
    %p79 = scmp.eq.s32.totalorder %s16, 3
    %p80 = por %p78, %p79
    %p81 = scmp.ne.s32.totalorder %s70, %s71
    %p82 = scmp.eq.s32.totalorder %s16, 0
    %p83 = por %p81, %p82
    %p84 = scmp.ne.s32.totalorder %s70, %s71
    %p85 = scmp.eq.s32.totalorder %s17, 3
    %p86 = por %p84, %p85
    %p88 = scmp.ne.s32.totalorder %s71, %s87
    %p89 = scmp.eq.s32.totalorder %s17, 0
    %p90 = por %p88, %p89
    %s92 = sadd.s32 %s91, 1
    %p95 = scmp.eq.s32.totalorder %s11, 3
    %p96 = scmp.ne.s32.totalorder %s91, %s93
    %p97 = scmp.eq.s32.totalorder %s11, 0
    %p98 = por %p96, %p97
    %p99 = scmp.ne.s32.totalorder %s91, %s93
    %p100 = scmp.eq.s32.totalorder %s16, 3
    %p101 = por %p99, %p100
    %p102 = scmp.ne.s32.totalorder %s93, %s94
    %p103 = scmp.eq.s32.totalorder %s16, 0
    %p104 = por %p102, %p103
    %p105 = scmp.ne.s32.totalorder %s93, %s94
    %p106 = scmp.eq.s32.totalorder %s17, 3
    %p107 = por %p105, %p106
    %p109 = scmp.ne.s32.totalorder %s94, %s108
    %p110 = scmp.eq.s32.totalorder %s17, 0
    %p111 = por %p109, %p110
    %s113 = sadd.s32 %s112, 1
    %p116 = scmp.eq.s32.totalorder %s11, 3
    %p117 = scmp.ne.s32.totalorder %s112, %s114
    %p118 = scmp.eq.s32.totalorder %s11, 0
    %p119 = por %p117, %p118
    %p120 = scmp.ne.s32.totalorder %s112, %s114
    %p121 = scmp.eq.s32.totalorder %s16, 3
    %p122 = por %p120, %p121
    %p123 = scmp.ne.s32.totalorder %s114, %s115
    %p124 = scmp.eq.s32.totalorder %s16, 0
    %p125 = por %p123, %p124
    %p126 = scmp.ne.s32.totalorder %s114, %s115
    %p127 = scmp.eq.s32.totalorder %s17, 3
    %p128 = por %p126, %p127
    %p130 = scmp.ne.s32.totalorder %s115, %s129
    %p131 = scmp.eq.s32.totalorder %s17, 0
    %p132 = por %p130, %p131
    %s134 = sadd.s32 %s133, 1
    %p137 = scmp.eq.s32.totalorder %s11, 3
    %p138 = scmp.ne.s32.totalorder %s133, %s135
    %p139 = scmp.eq.s32.totalorder %s11, 0
    %p140 = por %p138, %p139
    %p141 = scmp.ne.s32.totalorder %s133, %s135
    %p142 = scmp.eq.s32.totalorder %s16, 3
    %p143 = por %p141, %p142
    %p144 = scmp.ne.s32.totalorder %s135, %s136
    %p145 = scmp.eq.s32.totalorder %s16, 0
    %p146 = por %p144, %p145
    %p147 = scmp.ne.s32.totalorder %s135, %s136
    %p148 = scmp.eq.s32.totalorder %s17, 3
    %p149 = por %p147, %p148
    %p151 = scmp.ne.s32.totalorder %s136, %s150
    %p152 = scmp.eq.s32.totalorder %s17, 0
    %p153 = por %p151, %p152
    %s154 = ssub.s32 %s18, %s30
    %s155 = ssub.s32 %s19, %s26
    %s156 = sor.u32 %s154, %s155
    %p157 = scmp.eq.s32.totalorder %s156, 0
    %s159 = sadd.s32 %s158, 1
    %s160 = scalar_select %p157, %s158, %s159
    %p163 = pneg %p157
    %p164 = scmp.eq.s32.totalorder %s11, 3
    %p165 = por %p163, %p164
    %p166 = scmp.ne.s32.totalorder %s158, %s161
    %p167 = scmp.eq.s32.totalorder %s11, 0
    %p168 = por %p166, %p167
    %p169 = scmp.ne.s32.totalorder %s158, %s161
    %p170 = scmp.eq.s32.totalorder %s16, 3
    %p171 = por %p169, %p170
    %p172 = scmp.ne.s32.totalorder %s161, %s162
    %p173 = scmp.eq.s32.totalorder %s16, 0
    %p174 = por %p172, %p173
    %p175 = scmp.ne.s32.totalorder %s161, %s162
    %p176 = scmp.eq.s32.totalorder %s17, 3
    %p177 = por %p175, %p176
    %p179 = scmp.ne.s32.totalorder %s162, %s178
    %p180 = scmp.eq.s32.totalorder %s17, 0
    %p181 = por %p179, %p180
    %p182 = scmp.le.s32.totalorder 1, %s11
    %p183 = scmp.lt.s32.totalorder %s11, 5
    %p184 = pnand %p182, %p183
    %p185 = pneg %p184
    // Predicated region
    $region9: #{tpu_custom_call.1} parent=5 // pred_check
      _
    $region10: #{tpu_custom_call.1} parent=5 // pred_check_branch
      %187 = sbr.rel (%p184) target = $region12
    $region11: #{tpu_custom_call.1} parent=5 // pred_region
      %s188 = ssub.s32 %s11, 1
      // Predicated region
      $region13: #{tpu_custom_call.1} parent=11 // pred_check
        %p189 = pneg %p104
      $region14: #{tpu_custom_call.1} parent=11 // pred_check_branch
        %191 = sbr.rel (%p189) target = $region16
      $region15: #{tpu_custom_call.1} parent=11 // pred_region
        _
      $region16: #{tpu_custom_call.1} parent=11 // pred_fallthru
        _
      // Predicated region
      $region17: #{tpu_custom_call.1} parent=11 // pred_check
        %p192 = pneg %p125
      $region18: #{tpu_custom_call.1} parent=11 // pred_check_branch
        %194 = sbr.rel (%p192) target = $region20
      $region19: #{tpu_custom_call.1} parent=11 // pred_region
        _
      $region20: #{tpu_custom_call.1} parent=11 // pred_fallthru
        _
      // Predicated region
      $region21: #{tpu_custom_call.1} parent=11 // pred_check
        %p195 = pneg %p146
      $region22: #{tpu_custom_call.1} parent=11 // pred_check_branch
        %197 = sbr.rel (%p195) target = $region24
      $region23: #{tpu_custom_call.1} parent=11 // pred_region
        _
      $region24: #{tpu_custom_call.1} parent=11 // pred_fallthru
        _
    $region12: #{tpu_custom_call.1} parent=5 // pred_fallthru
      _
    %p198 = scmp.lt.s32.totalorder %s11, 4
    // Predicated region
    $region25: #{tpu_custom_call.1} parent=5 // pred_check
      %p199 = pneg %p198
    $region26: #{tpu_custom_call.1} parent=5 // pred_check_branch
      %201 = sbr.rel (%p199) target = $region28
    $region27: #{tpu_custom_call.1} parent=5 // pred_region
      // Predicated region
      $region29: #{tpu_custom_call.1} parent=27 // pred_check
        %p202 = pneg %p47
      $region30: #{tpu_custom_call.1} parent=27 // pred_check_branch
        %204 = sbr.rel (%p202) target = $region32
      $region31: #{tpu_custom_call.1} parent=27 // pred_region
        %s205 = smul.u32 %s18, 2
        %s206 = sadd.s32 %s205, %s19
        %p207 = scmp.lt.s32.totalorder %s206, 3
        %s208 = scalar_select %p207, %s206, 3
        %s209 = smul.addr %s208, 30
        %s210 = smul.addr %s209, 8
        %s211 = scalar_lea.vmem %s0, %s210
        %s212 = smul.u32 %s18, 2
        %s213 = sadd.s32 %s212, %s19
      $region32: #{tpu_custom_call.1} parent=27 // pred_fallthru
        _
      // Predicated region
      $region33: #{tpu_custom_call.1} parent=27 // pred_check
        %p214 = pneg %p77
      $region34: #{tpu_custom_call.1} parent=27 // pred_check_branch
        %216 = sbr.rel (%p214) target = $region36
      $region35: #{tpu_custom_call.1} parent=27 // pred_region
        %s217 = smul.u32 %s18, 2
        %s218 = sadd.s32 %s217, %s19
        %p219 = scmp.lt.s32.totalorder %s218, 3
        %s220 = scalar_select %p219, %s218, 3
        %s221 = smul.addr %s220, 12
        %s222 = smul.addr %s221, 8
        %s223 = scalar_lea.vmem %s1, %s222
        %s224 = smul.u32 %s18, 2
        %s225 = sadd.s32 %s224, %s19
      $region36: #{tpu_custom_call.1} parent=27 // pred_fallthru
        _
    $region28: #{tpu_custom_call.1} parent=5 // pred_fallthru
      _
    %p226 = scmp.le.s32.totalorder 1, %s11
    %p227 = scmp.lt.s32.totalorder %s11, 5
    %p228 = pnand %p226, %p227
    %p229 = pneg %p228
    // Predicated region
    $region37: #{tpu_custom_call.1} parent=5 // pred_check
      _
    $region38: #{tpu_custom_call.1} parent=5 // pred_check_branch
      %231 = sbr.rel (%p228) target = $region40
    $region39: #{tpu_custom_call.1} parent=5 // pred_region
      %s232 = ssub.s32 %s11, 1
      %s233 = smul.u32 %s20, 2
      %s234 = sadd.s32 %s233, %s21
      %p235 = scmp.lt.s32.totalorder %s234, 3
      %s236 = scalar_select %p235, %s234, 3
      %s237 = smul.addr %s236, 30
      %s238 = smul.addr %s237, 8
      %s239 = scalar_lea.vmem %s0, %s238
      %p240 = pneg %p53
      %p241 = pneg %p50
      %s242 = smul.u32 %s20, 2
      %s243 = sadd.s32 %s242, %s21
      %p244 = scmp.lt.s32.totalorder %s243, 3
      %s245 = scalar_select %p244, %s243, 3
      %s246 = smul.addr %s245, 12
      %s247 = smul.addr %s246, 8
      %s248 = scalar_lea.vmem %s1, %s247
      %p249 = pneg %p83
      %p250 = pneg %p80
      %p251 = pneg %p104
      %p252 = pneg %p101
      %p253 = pneg %p125
      %p254 = pneg %p122
      %p255 = pneg %p146
      %p256 = pneg %p143
      %p257 = pneg %p174
      %p258 = pneg %p171
      %s259 = smul.u32 8, %s21
      %p260 = scmp.lt.s32.totalorder %s20, 1
      %s261 = scalar_select %p260, %s20, 1
      %p262 = scmp.lt.s32.totalorder %s259, 15
      %s263 = scalar_select %p262, %s259, 15
      %s264 = smul.addr %s263, 2
      %s265 = smul.addr %s261, 32
      %s266 = sadd.s32 %s264, %s265
      %s267 = smul.addr %s266, 8
      %s268 = scalar_lea.vmem %s5, %s267
      %s269 = smul.u32 %s20, 2
      %s270 = sadd.s32 %s269, %s21
      %p271 = scmp.lt.s32.totalorder %s270, 3
      %s272 = scalar_select %p271, %s270, 3
      %s273 = smul.addr %s272, 30
      %s274 = smul.addr %s273, 8
      %s275 = scalar_lea.vmem %s0, %s274
      %s276 = smul.u32 %s20, 2
      %s277 = sadd.s32 %s276, %s21
      %s278 = smul.u32 %s20, 2
      %s279 = sadd.s32 %s278, %s21
      %p280 = scmp.lt.s32.totalorder %s279, 3
      %s281 = scalar_select %p280, %s279, 3
      %s282 = smul.addr %s281, 12
      %s283 = smul.addr %s282, 8
      %s284 = scalar_lea.vmem %s1, %s283
      %s285 = smul.u32 %s20, 2
      %s286 = sadd.s32 %s285, %s21
      %s287 = smul.u32 8, %s21
      %p288 = scmp.lt.s32.totalorder %s20, 1
      %s289 = scalar_select %p288, %s20, 1
      %p290 = scmp.lt.s32.totalorder %s287, 15
      %s291 = scalar_select %p290, %s287, 15
      %s292 = smul.addr %s291, 2
      %s293 = smul.addr %s289, 32
      %s294 = sadd.s32 %s292, %s293
      %s295 = smul.addr %s294, 8
      %s296 = scalar_lea.vmem %s5, %s295
      %s297 = smul.u32 8, %s21
      %v298 = vld [vmem:[%s275] sm:$0xff]
      %v299 = vld [vmem:[%s275 + $0x8] sm:$0xff]
      %v300 = vld [vmem:[%s275 + $0x18] sm:$0xff]
      %v301 = vld [vmem:[%s275 + $0x20] sm:$0xff]
      %v302 = vld [vmem:[%s275 + $0x30] sm:$0xff]
      %v303 = vld [vmem:[%s275 + $0x38] sm:$0xff]
      %v304 = vld [vmem:[%s275 + $0x48] sm:$0xff]
      %v305 = vld [vmem:[%s275 + $0x50] sm:$0xff]
      %v306 = vld [vmem:[%s275 + $0x60] sm:$0xff]
      %v307 = vld [vmem:[%s275 + $0x68] sm:$0xff]
      %v308 = vld [vmem:[%s275 + $0x78] sm:$0xff]
      %v309 = vld [vmem:[%s275 + $0x80] sm:$0xff]
      %v310 = vld [vmem:[%s275 + $0x90] sm:$0xff]
      %v311 = vld [vmem:[%s275 + $0x98] sm:$0xff]
      %v312 = vld [vmem:[%s275 + $0xa8] sm:$0xff]
      %v313 = vld [vmem:[%s275 + $0xb0] sm:$0xff]
      %v314 = vld [vmem:[%s275 + $0x1] sm:$0xff]
      %v315 = vld [vmem:[%s275 + $0x9] sm:$0xff]
      %v316 = vld [vmem:[%s275 + $0x19] sm:$0xff]
      %v317 = vld [vmem:[%s275 + $0x21] sm:$0xff]
      %v318 = vld [vmem:[%s275 + $0x31] sm:$0xff]
      %v319 = vld [vmem:[%s275 + $0x39] sm:$0xff]
      %v320 = vld [vmem:[%s275 + $0x49] sm:$0xff]
      %v321 = vld [vmem:[%s275 + $0x51] sm:$0xff]
      %v322 = vld [vmem:[%s275 + $0x61] sm:$0xff]
      %v323 = vld [vmem:[%s275 + $0x69] sm:$0xff]
      %v324 = vld [vmem:[%s275 + $0x79] sm:$0xff]
      %v325 = vld [vmem:[%s275 + $0x81] sm:$0xff]
      %v326 = vld [vmem:[%s275 + $0x91] sm:$0xff]
      %v327 = vld [vmem:[%s275 + $0x99] sm:$0xff]
      %v328 = vld [vmem:[%s275 + $0xa9] sm:$0xff]
      %v329 = vld [vmem:[%s275 + $0xb1] sm:$0xff]
      %v330 = vld [vmem:[%s275 + $0x2] sm:$0xff]
      %v331 = vld [vmem:[%s275 + $0xa] sm:$0xff]
      %v332 = vld [vmem:[%s275 + $0x1a] sm:$0xff]
      %v333 = vld [vmem:[%s275 + $0x22] sm:$0xff]
      %v334 = vld [vmem:[%s275 + $0x32] sm:$0xff]
      %v335 = vld [vmem:[%s275 + $0x3a] sm:$0xff]
      %v336 = vld [vmem:[%s275 + $0x4a] sm:$0xff]
      %v337 = vld [vmem:[%s275 + $0x52] sm:$0xff]
      %v338 = vld [vmem:[%s275 + $0x62] sm:$0xff]
      %v339 = vld [vmem:[%s275 + $0x6a] sm:$0xff]
      %v340 = vld [vmem:[%s275 + $0x7a] sm:$0xff]
      %v341 = vld [vmem:[%s275 + $0x82] sm:$0xff]
      %v342 = vld [vmem:[%s275 + $0x92] sm:$0xff]
      %v343 = vld [vmem:[%s275 + $0x9a] sm:$0xff]
      %v344 = vld [vmem:[%s275 + $0xaa] sm:$0xff]
      %v345 = vld [vmem:[%s275 + $0xb2] sm:$0xff]
      %s346 = scalar_lea.vmem %s275, 24
      %v347 = vld [vmem:[%s346] sm:$0xff]
      %v348 = vld [vmem:[%s346 + $0x8] sm:$0xff]
      %v349 = vld [vmem:[%s346 + $0x18] sm:$0xff]
      %v350 = vld [vmem:[%s346 + $0x20] sm:$0xff]
      %v351 = vld [vmem:[%s346 + $0x30] sm:$0xff]
      %v352 = vld [vmem:[%s346 + $0x38] sm:$0xff]
      %v353 = vld [vmem:[%s346 + $0x48] sm:$0xff]
      %v354 = vld [vmem:[%s346 + $0x50] sm:$0xff]
      %v355 = vld [vmem:[%s346 + $0x60] sm:$0xff]
      %v356 = vld [vmem:[%s346 + $0x68] sm:$0xff]
      %v357 = vld [vmem:[%s346 + $0x78] sm:$0xff]
      %v358 = vld [vmem:[%s346 + $0x80] sm:$0xff]
      %v359 = vld [vmem:[%s346 + $0x90] sm:$0xff]
      %v360 = vld [vmem:[%s346 + $0x98] sm:$0xff]
      %v361 = vld [vmem:[%s346 + $0xa8] sm:$0xff]
      %v362 = vld [vmem:[%s346 + $0xb0] sm:$0xff]
      %v363 = vld [vmem:[%s346 + $0x1] sm:$0xff]
      %v364 = vld [vmem:[%s346 + $0x9] sm:$0xff]
      %v365 = vld [vmem:[%s346 + $0x19] sm:$0xff]
      %v366 = vld [vmem:[%s346 + $0x21] sm:$0xff]
      %v367 = vld [vmem:[%s346 + $0x31] sm:$0xff]
      %v368 = vld [vmem:[%s346 + $0x39] sm:$0xff]
      %v369 = vld [vmem:[%s346 + $0x49] sm:$0xff]
      %v370 = vld [vmem:[%s346 + $0x51] sm:$0xff]
      %v371 = vld [vmem:[%s346 + $0x61] sm:$0xff]
      %v372 = vld [vmem:[%s346 + $0x69] sm:$0xff]
      %v373 = vld [vmem:[%s346 + $0x79] sm:$0xff]
      %v374 = vld [vmem:[%s346 + $0x81] sm:$0xff]
      %v375 = vld [vmem:[%s346 + $0x91] sm:$0xff]
      %v376 = vld [vmem:[%s346 + $0x99] sm:$0xff]
      %v377 = vld [vmem:[%s346 + $0xa9] sm:$0xff]
      %v378 = vld [vmem:[%s346 + $0xb1] sm:$0xff]
      %v379 = vld [vmem:[%s346 + $0x2] sm:$0xff]
      %v380 = vld [vmem:[%s346 + $0xa] sm:$0xff]
      %v381 = vld [vmem:[%s346 + $0x1a] sm:$0xff]
      %v382 = vld [vmem:[%s346 + $0x22] sm:$0xff]
      %v383 = vld [vmem:[%s346 + $0x32] sm:$0xff]
      %v384 = vld [vmem:[%s346 + $0x3a] sm:$0xff]
      %v385 = vld [vmem:[%s346 + $0x4a] sm:$0xff]
      %v386 = vld [vmem:[%s346 + $0x52] sm:$0xff]
      %v387 = vld [vmem:[%s346 + $0x62] sm:$0xff]
      %v388 = vld [vmem:[%s346 + $0x6a] sm:$0xff]
      %v389 = vld [vmem:[%s346 + $0x7a] sm:$0xff]
      %v390 = vld [vmem:[%s346 + $0x82] sm:$0xff]
      %v391 = vld [vmem:[%s346 + $0x92] sm:$0xff]
      %v392 = vld [vmem:[%s346 + $0x9a] sm:$0xff]
      %v393 = vld [vmem:[%s346 + $0xaa] sm:$0xff]
      %v394 = vld [vmem:[%s346 + $0xb2] sm:$0xff]
      %s395 = scalar_lea.vmem %s275, 48
      %v396 = vld [vmem:[%s395] sm:$0xff]
      %v397 = vld [vmem:[%s395 + $0x8] sm:$0xff]
      %v398 = vld [vmem:[%s395 + $0x18] sm:$0xff]
      %v399 = vld [vmem:[%s395 + $0x20] sm:$0xff]
      %v400 = vld [vmem:[%s395 + $0x30] sm:$0xff]
      %v401 = vld [vmem:[%s395 + $0x38] sm:$0xff]
      %v402 = vld [vmem:[%s395 + $0x48] sm:$0xff]
      %v403 = vld [vmem:[%s395 + $0x50] sm:$0xff]
      %v404 = vld [vmem:[%s395 + $0x60] sm:$0xff]
      %v405 = vld [vmem:[%s395 + $0x68] sm:$0xff]
      %v406 = vld [vmem:[%s395 + $0x78] sm:$0xff]
      %v407 = vld [vmem:[%s395 + $0x80] sm:$0xff]
      %v408 = vld [vmem:[%s395 + $0x90] sm:$0xff]
      %v409 = vld [vmem:[%s395 + $0x98] sm:$0xff]
      %v410 = vld [vmem:[%s395 + $0xa8] sm:$0xff]
      %v411 = vld [vmem:[%s395 + $0xb0] sm:$0xff]
      %v412 = vld [vmem:[%s395 + $0x1] sm:$0xff]
      %v413 = vld [vmem:[%s395 + $0x9] sm:$0xff]
      %v414 = vld [vmem:[%s395 + $0x19] sm:$0xff]
      %v415 = vld [vmem:[%s395 + $0x21] sm:$0xff]
      %v416 = vld [vmem:[%s395 + $0x31] sm:$0xff]
      %v417 = vld [vmem:[%s395 + $0x39] sm:$0xff]
      %v418 = vld [vmem:[%s395 + $0x49] sm:$0xff]
      %v419 = vld [vmem:[%s395 + $0x51] sm:$0xff]
      %v420 = vld [vmem:[%s395 + $0x61] sm:$0xff]
      %v421 = vld [vmem:[%s395 + $0x69] sm:$0xff]
      %v422 = vld [vmem:[%s395 + $0x79] sm:$0xff]
      %v423 = vld [vmem:[%s395 + $0x81] sm:$0xff]
      %v424 = vld [vmem:[%s395 + $0x91] sm:$0xff]
      %v425 = vld [vmem:[%s395 + $0x99] sm:$0xff]
      %v426 = vld [vmem:[%s395 + $0xa9] sm:$0xff]
      %v427 = vld [vmem:[%s395 + $0xb1] sm:$0xff]
      %v428 = vld [vmem:[%s395 + $0x2] sm:$0xff]
      %v429 = vld [vmem:[%s395 + $0xa] sm:$0xff]
      %v430 = vld [vmem:[%s395 + $0x1a] sm:$0xff]
      %v431 = vld [vmem:[%s395 + $0x22] sm:$0xff]
      %v432 = vld [vmem:[%s395 + $0x32] sm:$0xff]
      %v433 = vld [vmem:[%s395 + $0x3a] sm:$0xff]
      %v434 = vld [vmem:[%s395 + $0x4a] sm:$0xff]
      %v435 = vld [vmem:[%s395 + $0x52] sm:$0xff]
      %v436 = vld [vmem:[%s395 + $0x62] sm:$0xff]
      %v437 = vld [vmem:[%s395 + $0x6a] sm:$0xff]
      %v438 = vld [vmem:[%s395 + $0x7a] sm:$0xff]
      %v439 = vld [vmem:[%s395 + $0x82] sm:$0xff]
      %v440 = vld [vmem:[%s395 + $0x92] sm:$0xff]
      %v441 = vld [vmem:[%s395 + $0x9a] sm:$0xff]
      %v442 = vld [vmem:[%s395 + $0xaa] sm:$0xff]
      %v443 = vld [vmem:[%s395 + $0xb2] sm:$0xff]
      %460 = vrot.lane.b32.xlu0 %v314, 2
      %v461 = vpop.permute.xlu0 %460
      %462 = vrot.lane.b32.xlu0 %v315, 2
      %v463 = vpop.permute.xlu0 %462
      %464 = vrot.lane.b32.xlu0 %v316, 2
      %v465 = vpop.permute.xlu0 %464
      %466 = vrot.lane.b32.xlu0 %v317, 2
      %v467 = vpop.permute.xlu0 %466
      %468 = vrot.lane.b32.xlu0 %v318, 2
      %v469 = vpop.permute.xlu0 %468
      %470 = vrot.lane.b32.xlu0 %v319, 2
      %v471 = vpop.permute.xlu0 %470
      %472 = vrot.lane.b32.xlu0 %v320, 2
      %v473 = vpop.permute.xlu0 %472
      %474 = vrot.lane.b32.xlu0 %v321, 2
      %v475 = vpop.permute.xlu0 %474
      %476 = vrot.lane.b32.xlu0 %v322, 2
      %v477 = vpop.permute.xlu0 %476
      %478 = vrot.lane.b32.xlu0 %v323, 2
      %v479 = vpop.permute.xlu0 %478
      %480 = vrot.lane.b32.xlu0 %v324, 2
      %v481 = vpop.permute.xlu0 %480
      %482 = vrot.lane.b32.xlu0 %v325, 2
      %v483 = vpop.permute.xlu0 %482
      %484 = vrot.lane.b32.xlu0 %v326, 2
      %v485 = vpop.permute.xlu0 %484
      %486 = vrot.lane.b32.xlu0 %v327, 2
      %v487 = vpop.permute.xlu0 %486
      %488 = vrot.lane.b32.xlu0 %v328, 2
      %v489 = vpop.permute.xlu0 %488
      %490 = vrot.lane.b32.xlu0 %v329, 2
      %v491 = vpop.permute.xlu0 %490
      %524 = vrot.lane.b32.xlu0 %v330, 4
      %v525 = vpop.permute.xlu0 %524
      %526 = vrot.lane.b32.xlu0 %v331, 4
      %v527 = vpop.permute.xlu0 %526
      %528 = vrot.lane.b32.xlu0 %v332, 4
      %v529 = vpop.permute.xlu0 %528
      %530 = vrot.lane.b32.xlu0 %v333, 4
      %v531 = vpop.permute.xlu0 %530
      %532 = vrot.lane.b32.xlu0 %v334, 4
      %v533 = vpop.permute.xlu0 %532
      %534 = vrot.lane.b32.xlu0 %v335, 4
      %v535 = vpop.permute.xlu0 %534
      %536 = vrot.lane.b32.xlu0 %v336, 4
      %v537 = vpop.permute.xlu0 %536
      %538 = vrot.lane.b32.xlu0 %v337, 4
      %v539 = vpop.permute.xlu0 %538
      %540 = vrot.lane.b32.xlu0 %v338, 4
      %v541 = vpop.permute.xlu0 %540
      %542 = vrot.lane.b32.xlu0 %v339, 4
      %v543 = vpop.permute.xlu0 %542
      %544 = vrot.lane.b32.xlu0 %v340, 4
      %v545 = vpop.permute.xlu0 %544
      %546 = vrot.lane.b32.xlu0 %v341, 4
      %v547 = vpop.permute.xlu0 %546
      %548 = vrot.lane.b32.xlu0 %v342, 4
      %v549 = vpop.permute.xlu0 %548
      %550 = vrot.lane.b32.xlu0 %v343, 4
      %v551 = vpop.permute.xlu0 %550
      %552 = vrot.lane.b32.xlu0 %v344, 4
      %v553 = vpop.permute.xlu0 %552
      %554 = vrot.lane.b32.xlu0 %v345, 4
      %v555 = vpop.permute.xlu0 %554
      %588 = vrot.lane.b32.xlu0 %v347, 6
      %v589 = vpop.permute.xlu0 %588
      %590 = vrot.lane.b32.xlu0 %v348, 6
      %v591 = vpop.permute.xlu0 %590
      %592 = vrot.lane.b32.xlu0 %v349, 6
      %v593 = vpop.permute.xlu0 %592
      %594 = vrot.lane.b32.xlu0 %v350, 6
      %v595 = vpop.permute.xlu0 %594
      %596 = vrot.lane.b32.xlu0 %v351, 6
      %v597 = vpop.permute.xlu0 %596
      %598 = vrot.lane.b32.xlu0 %v352, 6
      %v599 = vpop.permute.xlu0 %598
      %600 = vrot.lane.b32.xlu0 %v353, 6
      %v601 = vpop.permute.xlu0 %600
      %602 = vrot.lane.b32.xlu0 %v354, 6
      %v603 = vpop.permute.xlu0 %602
      %604 = vrot.lane.b32.xlu0 %v355, 6
      %v605 = vpop.permute.xlu0 %604
      %606 = vrot.lane.b32.xlu0 %v356, 6
      %v607 = vpop.permute.xlu0 %606
      %608 = vrot.lane.b32.xlu0 %v357, 6
      %v609 = vpop.permute.xlu0 %608
      %610 = vrot.lane.b32.xlu0 %v358, 6
      %v611 = vpop.permute.xlu0 %610
      %612 = vrot.lane.b32.xlu0 %v359, 6
      %v613 = vpop.permute.xlu0 %612
      %614 = vrot.lane.b32.xlu0 %v360, 6
      %v615 = vpop.permute.xlu0 %614
      %616 = vrot.lane.b32.xlu0 %v361, 6
      %v617 = vpop.permute.xlu0 %616
      %618 = vrot.lane.b32.xlu0 %v362, 6
      %v619 = vpop.permute.xlu0 %618
      %652 = vrot.lane.b32.xlu0 %v363, 8
      %v653 = vpop.permute.xlu0 %652
      %654 = vrot.lane.b32.xlu0 %v364, 8
      %v655 = vpop.permute.xlu0 %654
      %656 = vrot.lane.b32.xlu0 %v365, 8
      %v657 = vpop.permute.xlu0 %656
      %658 = vrot.lane.b32.xlu0 %v366, 8
      %v659 = vpop.permute.xlu0 %658
      %660 = vrot.lane.b32.xlu0 %v367, 8
      %v661 = vpop.permute.xlu0 %660
      %662 = vrot.lane.b32.xlu0 %v368, 8
      %v663 = vpop.permute.xlu0 %662
      %664 = vrot.lane.b32.xlu0 %v369, 8
      %v665 = vpop.permute.xlu0 %664
      %666 = vrot.lane.b32.xlu0 %v370, 8
      %v667 = vpop.permute.xlu0 %666
      %668 = vrot.lane.b32.xlu0 %v371, 8
      %v669 = vpop.permute.xlu0 %668
      %670 = vrot.lane.b32.xlu0 %v372, 8
      %v671 = vpop.permute.xlu0 %670
      %672 = vrot.lane.b32.xlu0 %v373, 8
      %v673 = vpop.permute.xlu0 %672
      %674 = vrot.lane.b32.xlu0 %v374, 8
      %v675 = vpop.permute.xlu0 %674
      %676 = vrot.lane.b32.xlu0 %v375, 8
      %v677 = vpop.permute.xlu0 %676
      %678 = vrot.lane.b32.xlu0 %v376, 8
      %v679 = vpop.permute.xlu0 %678
      %680 = vrot.lane.b32.xlu0 %v377, 8
      %v681 = vpop.permute.xlu0 %680
      %682 = vrot.lane.b32.xlu0 %v378, 8
      %v683 = vpop.permute.xlu0 %682
      %716 = vrot.lane.b32.xlu0 %v379, 10
      %v717 = vpop.permute.xlu0 %716
      %718 = vrot.lane.b32.xlu0 %v380, 10
      %v719 = vpop.permute.xlu0 %718
      %720 = vrot.lane.b32.xlu0 %v381, 10
      %v721 = vpop.permute.xlu0 %720
      %722 = vrot.lane.b32.xlu0 %v382, 10
      %v723 = vpop.permute.xlu0 %722
      %724 = vrot.lane.b32.xlu0 %v383, 10
      %v725 = vpop.permute.xlu0 %724
      %726 = vrot.lane.b32.xlu0 %v384, 10
      %v727 = vpop.permute.xlu0 %726
      %728 = vrot.lane.b32.xlu0 %v385, 10
      %v729 = vpop.permute.xlu0 %728
      %730 = vrot.lane.b32.xlu0 %v386, 10
      %v731 = vpop.permute.xlu0 %730
      %732 = vrot.lane.b32.xlu0 %v387, 10
      %v733 = vpop.permute.xlu0 %732
      %734 = vrot.lane.b32.xlu0 %v388, 10
      %v735 = vpop.permute.xlu0 %734
      %736 = vrot.lane.b32.xlu0 %v389, 10
      %v737 = vpop.permute.xlu0 %736
      %738 = vrot.lane.b32.xlu0 %v390, 10
      %v739 = vpop.permute.xlu0 %738
      %740 = vrot.lane.b32.xlu0 %v391, 10
      %v741 = vpop.permute.xlu0 %740
      %742 = vrot.lane.b32.xlu0 %v392, 10
      %v743 = vpop.permute.xlu0 %742
      %744 = vrot.lane.b32.xlu0 %v393, 10
      %v745 = vpop.permute.xlu0 %744
      %746 = vrot.lane.b32.xlu0 %v394, 10
      %v747 = vpop.permute.xlu0 %746
      %780 = vrot.lane.b32.xlu0 %v396, 12
      %v781 = vpop.permute.xlu0 %780
      %782 = vrot.lane.b32.xlu0 %v397, 12
      %v783 = vpop.permute.xlu0 %782
      %784 = vrot.lane.b32.xlu0 %v398, 12
      %v785 = vpop.permute.xlu0 %784
      %786 = vrot.lane.b32.xlu0 %v399, 12
      %v787 = vpop.permute.xlu0 %786
      %788 = vrot.lane.b32.xlu0 %v400, 12
      %v789 = vpop.permute.xlu0 %788
      %790 = vrot.lane.b32.xlu0 %v401, 12
      %v791 = vpop.permute.xlu0 %790
      %792 = vrot.lane.b32.xlu0 %v402, 12
      %v793 = vpop.permute.xlu0 %792
      %794 = vrot.lane.b32.xlu0 %v403, 12
      %v795 = vpop.permute.xlu0 %794
      %796 = vrot.lane.b32.xlu0 %v404, 12
      %v797 = vpop.permute.xlu0 %796
      %798 = vrot.lane.b32.xlu0 %v405, 12
      %v799 = vpop.permute.xlu0 %798
      %800 = vrot.lane.b32.xlu0 %v406, 12
      %v801 = vpop.permute.xlu0 %800
      %802 = vrot.lane.b32.xlu0 %v407, 12
      %v803 = vpop.permute.xlu0 %802
      %804 = vrot.lane.b32.xlu0 %v408, 12
      %v805 = vpop.permute.xlu0 %804
      %806 = vrot.lane.b32.xlu0 %v409, 12
      %v807 = vpop.permute.xlu0 %806
      %808 = vrot.lane.b32.xlu0 %v410, 12
      %v809 = vpop.permute.xlu0 %808
      %810 = vrot.lane.b32.xlu0 %v411, 12
      %v811 = vpop.permute.xlu0 %810
      %844 = vrot.lane.b32.xlu0 %v412, 14
      %v845 = vpop.permute.xlu0 %844
      %846 = vrot.lane.b32.xlu0 %v413, 14
      %v847 = vpop.permute.xlu0 %846
      %848 = vrot.lane.b32.xlu0 %v414, 14
      %v849 = vpop.permute.xlu0 %848
      %850 = vrot.lane.b32.xlu0 %v415, 14
      %v851 = vpop.permute.xlu0 %850
      %852 = vrot.lane.b32.xlu0 %v416, 14
      %v853 = vpop.permute.xlu0 %852
      %854 = vrot.lane.b32.xlu0 %v417, 14
      %v855 = vpop.permute.xlu0 %854
      %856 = vrot.lane.b32.xlu0 %v418, 14
      %v857 = vpop.permute.xlu0 %856
      %858 = vrot.lane.b32.xlu0 %v419, 14
      %v859 = vpop.permute.xlu0 %858
      %860 = vrot.lane.b32.xlu0 %v420, 14
      %v861 = vpop.permute.xlu0 %860
      %862 = vrot.lane.b32.xlu0 %v421, 14
      %v863 = vpop.permute.xlu0 %862
      %864 = vrot.lane.b32.xlu0 %v422, 14
      %v865 = vpop.permute.xlu0 %864
      %866 = vrot.lane.b32.xlu0 %v423, 14
      %v867 = vpop.permute.xlu0 %866
      %868 = vrot.lane.b32.xlu0 %v424, 14
      %v869 = vpop.permute.xlu0 %868
      %870 = vrot.lane.b32.xlu0 %v425, 14
      %v871 = vpop.permute.xlu0 %870
      %872 = vrot.lane.b32.xlu0 %v426, 14
      %v873 = vpop.permute.xlu0 %872
      %874 = vrot.lane.b32.xlu0 %v427, 14
      %v875 = vpop.permute.xlu0 %874
      %908 = vrot.lane.b32.xlu0 %v428, 16
      %v909 = vpop.permute.xlu0 %908
      %910 = vrot.lane.b32.xlu0 %v429, 16
      %v911 = vpop.permute.xlu0 %910
      %912 = vrot.lane.b32.xlu0 %v430, 16
      %v913 = vpop.permute.xlu0 %912
      %914 = vrot.lane.b32.xlu0 %v431, 16
      %v915 = vpop.permute.xlu0 %914
      %916 = vrot.lane.b32.xlu0 %v432, 16
      %v917 = vpop.permute.xlu0 %916
      %918 = vrot.lane.b32.xlu0 %v433, 16
      %v919 = vpop.permute.xlu0 %918
      %920 = vrot.lane.b32.xlu0 %v434, 16
      %v921 = vpop.permute.xlu0 %920
      %922 = vrot.lane.b32.xlu0 %v435, 16
      %v923 = vpop.permute.xlu0 %922
      %924 = vrot.lane.b32.xlu0 %v436, 16
      %v925 = vpop.permute.xlu0 %924
      %926 = vrot.lane.b32.xlu0 %v437, 16
      %v927 = vpop.permute.xlu0 %926
      %928 = vrot.lane.b32.xlu0 %v438, 16
      %v929 = vpop.permute.xlu0 %928
      %930 = vrot.lane.b32.xlu0 %v439, 16
      %v931 = vpop.permute.xlu0 %930
      %932 = vrot.lane.b32.xlu0 %v440, 16
      %v933 = vpop.permute.xlu0 %932
      %934 = vrot.lane.b32.xlu0 %v441, 16
      %v935 = vpop.permute.xlu0 %934
      %936 = vrot.lane.b32.xlu0 %v442, 16
      %v937 = vpop.permute.xlu0 %936
      %938 = vrot.lane.b32.xlu0 %v443, 16
      %v939 = vpop.permute.xlu0 %938
      %vm956 = vcmask 15360
      %v957 = vsel %vm956, %v298, %v461
      %v958 = vsel %vm956, %v299, %v463
      %v959 = vsel %vm956, %v300, %v465
      %v960 = vsel %vm956, %v301, %v467
      %v961 = vsel %vm956, %v302, %v469
      %v962 = vsel %vm956, %v303, %v471
      %v963 = vsel %vm956, %v304, %v473
      %v964 = vsel %vm956, %v305, %v475
      %v965 = vsel %vm956, %v306, %v477
      %v966 = vsel %vm956, %v307, %v479
      %v967 = vsel %vm956, %v308, %v481
      %v968 = vsel %vm956, %v309, %v483
      %v969 = vsel %vm956, %v310, %v485
      %v970 = vsel %vm956, %v311, %v487
      %v971 = vsel %vm956, %v312, %v489
      %v972 = vsel %vm956, %v313, %v491
      %vm973 = vcmask 31744
      %v974 = vsel %vm973, %v957, %v525
      %v975 = vsel %vm973, %v958, %v527
      %v976 = vsel %vm973, %v959, %v529
      %v977 = vsel %vm973, %v960, %v531
      %v978 = vsel %vm973, %v961, %v533
      %v979 = vsel %vm973, %v962, %v535
      %v980 = vsel %vm973, %v963, %v537
      %v981 = vsel %vm973, %v964, %v539
      %v982 = vsel %vm973, %v965, %v541
      %v983 = vsel %vm973, %v966, %v543
      %v984 = vsel %vm973, %v967, %v545
      %v985 = vsel %vm973, %v968, %v547
      %v986 = vsel %vm973, %v969, %v549
      %v987 = vsel %vm973, %v970, %v551
      %v988 = vsel %vm973, %v971, %v553
      %v989 = vsel %vm973, %v972, %v555
      %vm990 = vcmask 48128
      %v991 = vsel %vm990, %v974, %v589
      %v992 = vsel %vm990, %v975, %v591
      %v993 = vsel %vm990, %v976, %v593
      %v994 = vsel %vm990, %v977, %v595
      %v995 = vsel %vm990, %v978, %v597
      %v996 = vsel %vm990, %v979, %v599
      %v997 = vsel %vm990, %v980, %v601
      %v998 = vsel %vm990, %v981, %v603
      %v999 = vsel %vm990, %v982, %v605
      %v1000 = vsel %vm990, %v983, %v607
      %v1001 = vsel %vm990, %v984, %v609
      %v1002 = vsel %vm990, %v985, %v611
      %v1003 = vsel %vm990, %v986, %v613
      %v1004 = vsel %vm990, %v987, %v615
      %v1005 = vsel %vm990, %v988, %v617
      %v1006 = vsel %vm990, %v989, %v619
      %vm1007 = vcmask 64512
      %v1008 = vsel %vm1007, %v991, %v653
      %v1009 = vsel %vm1007, %v992, %v655
      %v1010 = vsel %vm1007, %v993, %v657
      %v1011 = vsel %vm1007, %v994, %v659
      %v1012 = vsel %vm1007, %v995, %v661
      %v1013 = vsel %vm1007, %v996, %v663
      %v1014 = vsel %vm1007, %v997, %v665
      %v1015 = vsel %vm1007, %v998, %v667
      %v1016 = vsel %vm1007, %v999, %v669
      %v1017 = vsel %vm1007, %v1000, %v671
      %v1018 = vsel %vm1007, %v1001, %v673
      %v1019 = vsel %vm1007, %v1002, %v675
      %v1020 = vsel %vm1007, %v1003, %v677
      %v1021 = vsel %vm1007, %v1004, %v679
      %v1022 = vsel %vm1007, %v1005, %v681
      %v1023 = vsel %vm1007, %v1006, %v683
      %vm1024 = vcmask 80896
      %v1025 = vsel %vm1024, %v1008, %v717
      %v1026 = vsel %vm1024, %v1009, %v719
      %v1027 = vsel %vm1024, %v1010, %v721
      %v1028 = vsel %vm1024, %v1011, %v723
      %v1029 = vsel %vm1024, %v1012, %v725
      %v1030 = vsel %vm1024, %v1013, %v727
      %v1031 = vsel %vm1024, %v1014, %v729
      %v1032 = vsel %vm1024, %v1015, %v731
      %v1033 = vsel %vm1024, %v1016, %v733
      %v1034 = vsel %vm1024, %v1017, %v735
      %v1035 = vsel %vm1024, %v1018, %v737
      %v1036 = vsel %vm1024, %v1019, %v739
      %v1037 = vsel %vm1024, %v1020, %v741
      %v1038 = vsel %vm1024, %v1021, %v743
      %v1039 = vsel %vm1024, %v1022, %v745
      %v1040 = vsel %vm1024, %v1023, %v747
      %vm1041 = vcmask 97280
      %v1042 = vsel %vm1041, %v1025, %v781
      %v1043 = vsel %vm1041, %v1026, %v783
      %v1044 = vsel %vm1041, %v1027, %v785
      %v1045 = vsel %vm1041, %v1028, %v787
      %v1046 = vsel %vm1041, %v1029, %v789
      %v1047 = vsel %vm1041, %v1030, %v791
      %v1048 = vsel %vm1041, %v1031, %v793
      %v1049 = vsel %vm1041, %v1032, %v795
      %v1050 = vsel %vm1041, %v1033, %v797
      %v1051 = vsel %vm1041, %v1034, %v799
      %v1052 = vsel %vm1041, %v1035, %v801
      %v1053 = vsel %vm1041, %v1036, %v803
      %v1054 = vsel %vm1041, %v1037, %v805
      %v1055 = vsel %vm1041, %v1038, %v807
      %v1056 = vsel %vm1041, %v1039, %v809
      %v1057 = vsel %vm1041, %v1040, %v811
      %vm1058 = vcmask 113664
      %v1059 = vsel %vm1058, %v1042, %v845
      %v1060 = vsel %vm1058, %v1043, %v847
      %v1061 = vsel %vm1058, %v1044, %v849
      %v1062 = vsel %vm1058, %v1045, %v851
      %v1063 = vsel %vm1058, %v1046, %v853
      %v1064 = vsel %vm1058, %v1047, %v855
      %v1065 = vsel %vm1058, %v1048, %v857
      %v1066 = vsel %vm1058, %v1049, %v859
      %v1067 = vsel %vm1058, %v1050, %v861
      %v1068 = vsel %vm1058, %v1051, %v863
      %v1069 = vsel %vm1058, %v1052, %v865
      %v1070 = vsel %vm1058, %v1053, %v867
      %v1071 = vsel %vm1058, %v1054, %v869
      %v1072 = vsel %vm1058, %v1055, %v871
      %v1073 = vsel %vm1058, %v1056, %v873
      %v1074 = vsel %vm1058, %v1057, %v875
      %vm1075 = vcmask 130048
      %v1076 = vsel %vm1075, %v1059, %v909
      %v1077 = vsel %vm1075, %v1060, %v911
      %v1078 = vsel %vm1075, %v1061, %v913
      %v1079 = vsel %vm1075, %v1062, %v915
      %v1080 = vsel %vm1075, %v1063, %v917
      %v1081 = vsel %vm1075, %v1064, %v919
      %v1082 = vsel %vm1075, %v1065, %v921
      %v1083 = vsel %vm1075, %v1066, %v923
      %v1084 = vsel %vm1075, %v1067, %v925
      %v1085 = vsel %vm1075, %v1068, %v927
      %v1086 = vsel %vm1075, %v1069, %v929
      %v1087 = vsel %vm1075, %v1070, %v931
      %v1088 = vsel %vm1075, %v1071, %v933
      %v1089 = vsel %vm1075, %v1072, %v935
      %v1090 = vsel %vm1075, %v1073, %v937
      %v1091 = vsel %vm1075, %v1074, %v939
      %v1092 = vld [vmem:[%s2] sm:$0xff]
      %v1093 = vld [vmem:[%s2 + $0x8] sm:$0xff]
      %v1094 = vld [vmem:[%s2 + $0x10] sm:$0x3]
      %vm1095 = vcmask 146432
      %v1097 = vsel %vm1095, %v1076, 0
      %v1100 = vsel %vm1095, %v1077, 0
      %v1103 = vsel %vm1095, %v1078, 0
      %v1106 = vsel %vm1095, %v1079, 0
      %v1109 = vsel %vm1095, %v1080, 0
      %v1112 = vsel %vm1095, %v1081, 0
      %v1115 = vsel %vm1095, %v1082, 0
      %v1118 = vsel %vm1095, %v1083, 0
      %v1121 = vsel %vm1095, %v1084, 0
      %v1124 = vsel %vm1095, %v1085, 0
      %v1127 = vsel %vm1095, %v1086, 0
      %v1130 = vsel %vm1095, %v1087, 0
      %v1133 = vsel %vm1095, %v1088, 0
      %v1136 = vsel %vm1095, %v1089, 0
      %v1139 = vsel %vm1095, %v1090, 0
      %v1142 = vsel %vm1095, %v1091, 0
      %vm1144 = vcmask 1041408
      %v1146 = vsel %vm1144, %v1094, 0
      %1148 = vmatpush.msra.mxu0 0.0
      %1149 = vmatpush.msra.mxu0 0.0
      %1150 = vmatpush.msra.mxu0 0.0
      %1151 = vmatpush.msra.mxu0 0.0
      %1152 = vmatpush.msra.mxu0 0.0
      %1153 = vmatpush.msra.mxu0 0.0
      %1154 = vmatpush.msra.mxu0 0.0
      %1155 = vmatpush.msra.mxu0 0.0
      %1156 = vmatpush.msra.mxu0 0.0
      %1157 = vmatpush.msra.mxu0 0.0
      %1158 = vmatpush.msra.mxu0 0.0
      %1159 = vmatpush.msra.mxu0 0.0
      %1160 = vmatpush.msra.mxu0 0.0
      %1161 = vmatpush.msra.mxu0 %v1146
      %1162 = vmatpush.msra.mxu0 %v1093
      %1163 = vmatpush.msra.mxu0 %v1092
      %1164 = vmatmul.f32.gmra.mxu0 %v1097
      %v1165 = vpop.f32.mrf.mxu0
      %v1166 = vadd.f32 0.0, %v1165
      %1167 = vmatmul.f32.gmra.mxu0 %v1100
      %v1168 = vpop.f32.mrf.mxu0
      %v1169 = vadd.f32 0.0, %v1168
      %1170 = vmatmul.f32.gmra.mxu0 %v1103
      %v1171 = vpop.f32.mrf.mxu0
      %v1172 = vadd.f32 0.0, %v1171
      %1173 = vmatmul.f32.gmra.mxu0 %v1106
      %v1174 = vpop.f32.mrf.mxu0
      %v1175 = vadd.f32 0.0, %v1174
      %1176 = vmatmul.f32.gmra.mxu0 %v1109
      %v1177 = vpop.f32.mrf.mxu0
      %v1178 = vadd.f32 0.0, %v1177
      %1179 = vmatmul.f32.gmra.mxu0 %v1112
      %v1180 = vpop.f32.mrf.mxu0
      %v1181 = vadd.f32 0.0, %v1180
      %1182 = vmatmul.f32.gmra.mxu0 %v1115
      %v1183 = vpop.f32.mrf.mxu0
      %v1184 = vadd.f32 0.0, %v1183
      %1185 = vmatmul.f32.gmra.mxu0 %v1118
      %v1186 = vpop.f32.mrf.mxu0
      %v1187 = vadd.f32 0.0, %v1186
      %1188 = vmatmul.f32.gmra.mxu0 %v1121
      %v1189 = vpop.f32.mrf.mxu0
      %v1190 = vadd.f32 0.0, %v1189
      %1191 = vmatmul.f32.gmra.mxu0 %v1124
      %v1192 = vpop.f32.mrf.mxu0
      %v1193 = vadd.f32 0.0, %v1192
      %1194 = vmatmul.f32.gmra.mxu0 %v1127
      %v1195 = vpop.f32.mrf.mxu0
      %v1196 = vadd.f32 0.0, %v1195
      %1197 = vmatmul.f32.gmra.mxu0 %v1130
      %v1198 = vpop.f32.mrf.mxu0
      %v1199 = vadd.f32 0.0, %v1198
      %1200 = vmatmul.f32.gmra.mxu0 %v1133
      %v1201 = vpop.f32.mrf.mxu0
      %v1202 = vadd.f32 0.0, %v1201
      %1203 = vmatmul.f32.gmra.mxu0 %v1136
      %v1204 = vpop.f32.mrf.mxu0
      %v1205 = vadd.f32 0.0, %v1204
      %1206 = vmatmul.f32.gmra.mxu0 %v1139
      %v1207 = vpop.f32.mrf.mxu0
      %v1208 = vadd.f32 0.0, %v1207
      %1209 = vmatmul.f32.gmra.mxu0 %v1142
      %v1210 = vpop.f32.mrf.mxu0
      %v1211 = vadd.f32 0.0, %v1210
      %1212 = vdwg.mxu0
      %v1213 = vld [vmem:[%s284] sm:$0xff]
      %v1214 = vld [vmem:[%s284 + $0x10] sm:$0xff]
      %v1215 = vld [vmem:[%s284 + $0x20] sm:$0xff]
      %v1216 = vld [vmem:[%s284 + $0x30] sm:$0xff]
      %v1217 = vld [vmem:[%s284 + $0x1] sm:$0xff]
      %v1218 = vld [vmem:[%s284 + $0x11] sm:$0xff]
      %v1219 = vld [vmem:[%s284 + $0x21] sm:$0xff]
      %v1220 = vld [vmem:[%s284 + $0x31] sm:$0xff]
      %v1221 = vld [vmem:[%s284 + $0x2] sm:$0xff]
      %v1222 = vld [vmem:[%s284 + $0x12] sm:$0xff]
      %v1223 = vld [vmem:[%s284 + $0x22] sm:$0xff]
      %v1224 = vld [vmem:[%s284 + $0x32] sm:$0xff]
      %s1225 = scalar_lea.vmem %s284, 16
      %v1226 = vld [vmem:[%s1225] sm:$0xff]
      %v1227 = vld [vmem:[%s1225 + $0x10] sm:$0xff]
      %v1228 = vld [vmem:[%s1225 + $0x20] sm:$0xff]
      %v1229 = vld [vmem:[%s1225 + $0x30] sm:$0xff]
      %v1230 = vld [vmem:[%s1225 + $0x1] sm:$0xff]
      %v1231 = vld [vmem:[%s1225 + $0x11] sm:$0xff]
      %v1232 = vld [vmem:[%s1225 + $0x21] sm:$0xff]
      %v1233 = vld [vmem:[%s1225 + $0x31] sm:$0xff]
      %v1234 = vld [vmem:[%s1225 + $0x2] sm:$0xff]
      %v1235 = vld [vmem:[%s1225 + $0x12] sm:$0xff]
      %v1236 = vld [vmem:[%s1225 + $0x22] sm:$0xff]
      %v1237 = vld [vmem:[%s1225 + $0x32] sm:$0xff]
      %s1238 = scalar_lea.vmem %s284, 32
      %v1239 = vld [vmem:[%s1238] sm:$0xff]
      %v1240 = vld [vmem:[%s1238 + $0x10] sm:$0xff]
      %v1241 = vld [vmem:[%s1238 + $0x20] sm:$0xff]
      %v1242 = vld [vmem:[%s1238 + $0x30] sm:$0xff]
      %v1243 = vld [vmem:[%s1238 + $0x1] sm:$0xff]
      %v1244 = vld [vmem:[%s1238 + $0x11] sm:$0xff]
      %v1245 = vld [vmem:[%s1238 + $0x21] sm:$0xff]
      %v1246 = vld [vmem:[%s1238 + $0x31] sm:$0xff]
      %v1247 = vld [vmem:[%s1238 + $0x2] sm:$0xff]
      %v1248 = vld [vmem:[%s1238 + $0x12] sm:$0xff]
      %v1249 = vld [vmem:[%s1238 + $0x22] sm:$0xff]
      %v1250 = vld [vmem:[%s1238 + $0x32] sm:$0xff]
      %1255 = vrot.lane.b32.xlu0 %v1217, 2
      %v1256 = vpop.permute.xlu0 %1255
      %1257 = vrot.lane.b32.xlu0 %v1218, 2
      %v1258 = vpop.permute.xlu0 %1257
      %1259 = vrot.lane.b32.xlu0 %v1219, 2
      %v1260 = vpop.permute.xlu0 %1259
      %1261 = vrot.lane.b32.xlu0 %v1220, 2
      %v1262 = vpop.permute.xlu0 %1261
      %1271 = vrot.lane.b32.xlu0 %v1221, 4
      %v1272 = vpop.permute.xlu0 %1271
      %1273 = vrot.lane.b32.xlu0 %v1222, 4
      %v1274 = vpop.permute.xlu0 %1273
      %1275 = vrot.lane.b32.xlu0 %v1223, 4
      %v1276 = vpop.permute.xlu0 %1275
      %1277 = vrot.lane.b32.xlu0 %v1224, 4
      %v1278 = vpop.permute.xlu0 %1277
      %1287 = vrot.lane.b32.xlu0 %v1226, 6
      %v1288 = vpop.permute.xlu0 %1287
      %1289 = vrot.lane.b32.xlu0 %v1227, 6
      %v1290 = vpop.permute.xlu0 %1289
      %1291 = vrot.lane.b32.xlu0 %v1228, 6
      %v1292 = vpop.permute.xlu0 %1291
      %1293 = vrot.lane.b32.xlu0 %v1229, 6
      %v1294 = vpop.permute.xlu0 %1293
      %1303 = vrot.lane.b32.xlu0 %v1230, 8
      %v1304 = vpop.permute.xlu0 %1303
      %1305 = vrot.lane.b32.xlu0 %v1231, 8
      %v1306 = vpop.permute.xlu0 %1305
      %1307 = vrot.lane.b32.xlu0 %v1232, 8
      %v1308 = vpop.permute.xlu0 %1307
      %1309 = vrot.lane.b32.xlu0 %v1233, 8
      %v1310 = vpop.permute.xlu0 %1309
      %1319 = vrot.lane.b32.xlu0 %v1234, 10
      %v1320 = vpop.permute.xlu0 %1319
      %1321 = vrot.lane.b32.xlu0 %v1235, 10
      %v1322 = vpop.permute.xlu0 %1321
      %1323 = vrot.lane.b32.xlu0 %v1236, 10
      %v1324 = vpop.permute.xlu0 %1323
      %1325 = vrot.lane.b32.xlu0 %v1237, 10
      %v1326 = vpop.permute.xlu0 %1325
      %1335 = vrot.lane.b32.xlu0 %v1239, 12
      %v1336 = vpop.permute.xlu0 %1335
      %1337 = vrot.lane.b32.xlu0 %v1240, 12
      %v1338 = vpop.permute.xlu0 %1337
      %1339 = vrot.lane.b32.xlu0 %v1241, 12
      %v1340 = vpop.permute.xlu0 %1339
      %1341 = vrot.lane.b32.xlu0 %v1242, 12
      %v1342 = vpop.permute.xlu0 %1341
      %1351 = vrot.lane.b32.xlu0 %v1243, 14
      %v1352 = vpop.permute.xlu0 %1351
      %1353 = vrot.lane.b32.xlu0 %v1244, 14
      %v1354 = vpop.permute.xlu0 %1353
      %1355 = vrot.lane.b32.xlu0 %v1245, 14
      %v1356 = vpop.permute.xlu0 %1355
      %1357 = vrot.lane.b32.xlu0 %v1246, 14
      %v1358 = vpop.permute.xlu0 %1357
      %1367 = vrot.lane.b32.xlu0 %v1247, 16
      %v1368 = vpop.permute.xlu0 %1367
      %1369 = vrot.lane.b32.xlu0 %v1248, 16
      %v1370 = vpop.permute.xlu0 %1369
      %1371 = vrot.lane.b32.xlu0 %v1249, 16
      %v1372 = vpop.permute.xlu0 %1371
      %1373 = vrot.lane.b32.xlu0 %v1250, 16
      %v1374 = vpop.permute.xlu0 %1373
      %v1379 = vsel %vm956, %v1213, %v1256
      %v1380 = vsel %vm956, %v1214, %v1258
      %v1381 = vsel %vm956, %v1215, %v1260
      %v1382 = vsel %vm956, %v1216, %v1262
      %v1383 = vsel %vm973, %v1379, %v1272
      %v1384 = vsel %vm973, %v1380, %v1274
      %v1385 = vsel %vm973, %v1381, %v1276
      %v1386 = vsel %vm973, %v1382, %v1278
      %v1387 = vsel %vm990, %v1383, %v1288
      %v1388 = vsel %vm990, %v1384, %v1290
      %v1389 = vsel %vm990, %v1385, %v1292
      %v1390 = vsel %vm990, %v1386, %v1294
      %v1391 = vsel %vm1007, %v1387, %v1304
      %v1392 = vsel %vm1007, %v1388, %v1306
      %v1393 = vsel %vm1007, %v1389, %v1308
      %v1394 = vsel %vm1007, %v1390, %v1310
      %v1395 = vsel %vm1024, %v1391, %v1320
      %v1396 = vsel %vm1024, %v1392, %v1322
      %v1397 = vsel %vm1024, %v1393, %v1324
      %v1398 = vsel %vm1024, %v1394, %v1326
      %v1399 = vsel %vm1041, %v1395, %v1336
      %v1400 = vsel %vm1041, %v1396, %v1338
      %v1401 = vsel %vm1041, %v1397, %v1340
      %v1402 = vsel %vm1041, %v1398, %v1342
      %v1403 = vsel %vm1058, %v1399, %v1352
      %v1404 = vsel %vm1058, %v1400, %v1354
      %v1405 = vsel %vm1058, %v1401, %v1356
      %v1406 = vsel %vm1058, %v1402, %v1358
      %v1407 = vsel %vm1075, %v1403, %v1368
      %v1408 = vsel %vm1075, %v1404, %v1370
      %v1409 = vsel %vm1075, %v1405, %v1372
      %v1410 = vsel %vm1075, %v1406, %v1374
      %v1411 = vld [vmem:[%s3] sm:$0xff]
      %v1412 = vld [vmem:[%s3 + $0x8] sm:$0xff]
      %v1413 = vld [vmem:[%s3 + $0x10] sm:$0x3]
      %v1415 = vsel %vm1095, %v1407, 0
      %v1418 = vsel %vm1095, %v1408, 0
      %v1421 = vsel %vm1095, %v1409, 0
      %v1424 = vsel %vm1095, %v1410, 0
      %v1427 = vsel %vm1144, %v1413, 0
      %1429 = vmatpush.msra.mxu0 0.0
      %1430 = vmatpush.msra.mxu0 0.0
      %1431 = vmatpush.msra.mxu0 0.0
      %1432 = vmatpush.msra.mxu0 0.0
      %1433 = vmatpush.msra.mxu0 0.0
      %1434 = vmatpush.msra.mxu0 0.0
      %1435 = vmatpush.msra.mxu0 0.0
      %1436 = vmatpush.msra.mxu0 0.0
      %1437 = vmatpush.msra.mxu0 0.0
      %1438 = vmatpush.msra.mxu0 0.0
      %1439 = vmatpush.msra.mxu0 0.0
      %1440 = vmatpush.msra.mxu0 0.0
      %1441 = vmatpush.msra.mxu0 0.0
      %1442 = vmatpush.msra.mxu0 %v1427
      %1443 = vmatpush.msra.mxu0 %v1412
      %1444 = vmatpush.msra.mxu0 %v1411
      %1445 = vmatmul.f32.gmra.mxu0 %v1415
      %v1446 = vpop.f32.mrf.mxu0
      %v1447 = vadd.f32 0.0, %v1446
      %1448 = vmatmul.f32.gmra.mxu0 %v1418
      %v1449 = vpop.f32.mrf.mxu0
      %v1450 = vadd.f32 0.0, %v1449
      %1451 = vmatmul.f32.gmra.mxu0 %v1421
      %v1452 = vpop.f32.mrf.mxu0
      %v1453 = vadd.f32 0.0, %v1452
      %1454 = vmatmul.f32.gmra.mxu0 %v1424
      %v1455 = vpop.f32.mrf.mxu0
      %v1456 = vadd.f32 0.0, %v1455
      %1457 = vdwg.mxu0
      %v1462 = vrot.slane %v1447, 1
      %v1463 = vrot.slane %v1447, 2
      %v1464 = vrot.slane %v1447, 3
      %v1465 = vrot.slane %v1447, 4
      %v1466 = vrot.slane %v1447, 5
      %v1467 = vrot.slane %v1447, 6
      %v1468 = vrot.slane %v1447, 7
      %v1469 = vrot.slane %v1450, 1
      %v1470 = vrot.slane %v1450, 2
      %v1471 = vrot.slane %v1450, 3
      %v1472 = vrot.slane %v1450, 4
      %v1473 = vrot.slane %v1450, 5
      %v1474 = vrot.slane %v1450, 6
      %v1475 = vrot.slane %v1450, 7
      %v1476 = vrot.slane %v1453, 1
      %v1477 = vrot.slane %v1453, 2
      %v1478 = vrot.slane %v1453, 3
      %v1479 = vrot.slane %v1453, 4
      %v1480 = vrot.slane %v1453, 5
      %v1481 = vrot.slane %v1453, 6
      %v1482 = vrot.slane %v1453, 7
      %v1483 = vrot.slane %v1456, 1
      %v1484 = vrot.slane %v1456, 2
      %v1485 = vrot.slane %v1456, 3
      %v1486 = vrot.slane %v1456, 4
      %v1487 = vrot.slane %v1456, 5
      %v1488 = vrot.slane %v1456, 6
      %v1489 = vrot.slane %v1456, 7
      %v1490 = vperm.slane %v1447, 0
      %v1491 = vperm.slane %v1462, 0
      %v1492 = vperm.slane %v1463, 0
      %v1493 = vperm.slane %v1464, 0
      %v1494 = vperm.slane %v1465, 0
      %v1495 = vperm.slane %v1466, 0
      %v1496 = vperm.slane %v1467, 0
      %v1497 = vperm.slane %v1468, 0
      %v1498 = vperm.slane %v1450, 0
      %v1499 = vperm.slane %v1469, 0
      %v1500 = vperm.slane %v1470, 0
      %v1501 = vperm.slane %v1471, 0
      %v1502 = vperm.slane %v1472, 0
      %v1503 = vperm.slane %v1473, 0
      %v1504 = vperm.slane %v1474, 0
      %v1505 = vperm.slane %v1475, 0
      %v1506 = vperm.slane %v1453, 0
      %v1507 = vperm.slane %v1476, 0
      %v1508 = vperm.slane %v1477, 0
      %v1509 = vperm.slane %v1478, 0
      %v1510 = vperm.slane %v1479, 0
      %v1511 = vperm.slane %v1480, 0
      %v1512 = vperm.slane %v1481, 0
      %v1513 = vperm.slane %v1482, 0
      %v1514 = vperm.slane %v1456, 0
      %v1515 = vperm.slane %v1483, 0
      %v1516 = vperm.slane %v1484, 0
      %v1517 = vperm.slane %v1485, 0
      %v1518 = vperm.slane %v1486, 0
      %v1519 = vperm.slane %v1487, 0
      %v1520 = vperm.slane %v1488, 0
      %v1521 = vperm.slane %v1489, 0
      %1522 = vst [vmem:[#allocation1] ss:$4 sm:$0xff] %v1490
      %s1523 = scalar_lea.vmem [#allocation1], 1
      %1524 = vst [vmem:[%s1523] ss:$4 sm:$0xff] %v1491
      %s1525 = scalar_lea.vmem [#allocation1], 2
      %1526 = vst [vmem:[%s1525] ss:$4 sm:$0xff] %v1492
      %s1527 = scalar_lea.vmem [#allocation1], 3
      %1528 = vst [vmem:[%s1527] ss:$4 sm:$0xff] %v1493
      %s1529 = scalar_lea.vmem [#allocation1], 32
      %1530 = vst [vmem:[%s1529] ss:$4 sm:$0xff] %v1494
      %s1531 = scalar_lea.vmem [#allocation1], 33
      %1532 = vst [vmem:[%s1531] ss:$4 sm:$0xff] %v1495
      %s1533 = scalar_lea.vmem [#allocation1], 34
      %1534 = vst [vmem:[%s1533] ss:$4 sm:$0xff] %v1496
      %s1535 = scalar_lea.vmem [#allocation1], 35
      %1536 = vst [vmem:[%s1535] ss:$4 sm:$0xff] %v1497
      %v1537 = vld.sshfl [vmem:[#allocation1] sm:$0xff pattern:$0x73625140]
      %v1538 = vld.sshfl [vmem:[#allocation1 + $0x20] sm:$0xff pattern:$0x73625140]
      %1539 = vst [vmem:[#allocation1] ss:$4 sm:$0xff] %v1490
      %1540 = vst [vmem:[%s1523] ss:$4 sm:$0xff] %v1491
      %1541 = vst [vmem:[%s1525] ss:$4 sm:$0xff] %v1492
      %1542 = vst [vmem:[%s1527] ss:$4 sm:$0xff] %v1493
      %1543 = vst [vmem:[%s1529] ss:$4 sm:$0xff] %v1494
      %1544 = vst [vmem:[%s1531] ss:$4 sm:$0xff] %v1495
      %1545 = vst [vmem:[%s1533] ss:$4 sm:$0xff] %v1496
      %1546 = vst [vmem:[%s1535] ss:$4 sm:$0xff] %v1497
      %v1547 = vld.sshfl [vmem:[#allocation1] sm:$0xff pattern:$0x73625140]
      %v1548 = vld.sshfl [vmem:[#allocation1 + $0x20] sm:$0xff pattern:$0x73625140]
      %1549 = vst [vmem:[#allocation1] ss:$4 sm:$0xff] %v1498
      %1550 = vst [vmem:[%s1523] ss:$4 sm:$0xff] %v1499
      %1551 = vst [vmem:[%s1525] ss:$4 sm:$0xff] %v1500
      %1552 = vst [vmem:[%s1527] ss:$4 sm:$0xff] %v1501
      %1553 = vst [vmem:[%s1529] ss:$4 sm:$0xff] %v1502
      %1554 = vst [vmem:[%s1531] ss:$4 sm:$0xff] %v1503
      %1555 = vst [vmem:[%s1533] ss:$4 sm:$0xff] %v1504
      %1556 = vst [vmem:[%s1535] ss:$4 sm:$0xff] %v1505
      %v1557 = vld.sshfl [vmem:[#allocation1] sm:$0xff pattern:$0x73625140]
      %v1558 = vld.sshfl [vmem:[#allocation1 + $0x20] sm:$0xff pattern:$0x73625140]
      %1559 = vst [vmem:[#allocation1] ss:$4 sm:$0xff] %v1498
      %1560 = vst [vmem:[%s1523] ss:$4 sm:$0xff] %v1499
      %1561 = vst [vmem:[%s1525] ss:$4 sm:$0xff] %v1500
      %1562 = vst [vmem:[%s1527] ss:$4 sm:$0xff] %v1501
      %1563 = vst [vmem:[%s1529] ss:$4 sm:$0xff] %v1502
      %1564 = vst [vmem:[%s1531] ss:$4 sm:$0xff] %v1503
      %1565 = vst [vmem:[%s1533] ss:$4 sm:$0xff] %v1504
      %1566 = vst [vmem:[%s1535] ss:$4 sm:$0xff] %v1505
      %v1567 = vld.sshfl [vmem:[#allocation1] sm:$0xff pattern:$0x73625140]
      %v1568 = vld.sshfl [vmem:[#allocation1 + $0x20] sm:$0xff pattern:$0x73625140]
      %1569 = vst [vmem:[#allocation1] ss:$4 sm:$0xff] %v1506
      %1570 = vst [vmem:[%s1523] ss:$4 sm:$0xff] %v1507
      %1571 = vst [vmem:[%s1525] ss:$4 sm:$0xff] %v1508
      %1572 = vst [vmem:[%s1527] ss:$4 sm:$0xff] %v1509
      %1573 = vst [vmem:[%s1529] ss:$4 sm:$0xff] %v1510
      %1574 = vst [vmem:[%s1531] ss:$4 sm:$0xff] %v1511
      %1575 = vst [vmem:[%s1533] ss:$4 sm:$0xff] %v1512
      %1576 = vst [vmem:[%s1535] ss:$4 sm:$0xff] %v1513
      %v1577 = vld.sshfl [vmem:[#allocation1] sm:$0xff pattern:$0x73625140]
      %v1578 = vld.sshfl [vmem:[#allocation1 + $0x20] sm:$0xff pattern:$0x73625140]
      %1579 = vst [vmem:[#allocation1] ss:$4 sm:$0xff] %v1506
      %1580 = vst [vmem:[%s1523] ss:$4 sm:$0xff] %v1507
      %1581 = vst [vmem:[%s1525] ss:$4 sm:$0xff] %v1508
      %1582 = vst [vmem:[%s1527] ss:$4 sm:$0xff] %v1509
      %1583 = vst [vmem:[%s1529] ss:$4 sm:$0xff] %v1510
      %1584 = vst [vmem:[%s1531] ss:$4 sm:$0xff] %v1511
      %1585 = vst [vmem:[%s1533] ss:$4 sm:$0xff] %v1512
      %1586 = vst [vmem:[%s1535] ss:$4 sm:$0xff] %v1513
      %v1587 = vld.sshfl [vmem:[#allocation1] sm:$0xff pattern:$0x73625140]
      %v1588 = vld.sshfl [vmem:[#allocation1 + $0x20] sm:$0xff pattern:$0x73625140]
      %1589 = vst [vmem:[#allocation1] ss:$4 sm:$0xff] %v1514
      %1590 = vst [vmem:[%s1523] ss:$4 sm:$0xff] %v1515
      %1591 = vst [vmem:[%s1525] ss:$4 sm:$0xff] %v1516
      %1592 = vst [vmem:[%s1527] ss:$4 sm:$0xff] %v1517
      %1593 = vst [vmem:[%s1529] ss:$4 sm:$0xff] %v1518
      %1594 = vst [vmem:[%s1531] ss:$4 sm:$0xff] %v1519
      %1595 = vst [vmem:[%s1533] ss:$4 sm:$0xff] %v1520
      %1596 = vst [vmem:[%s1535] ss:$4 sm:$0xff] %v1521
      %v1597 = vld.sshfl [vmem:[#allocation1] sm:$0xff pattern:$0x73625140]
      %v1598 = vld.sshfl [vmem:[#allocation1 + $0x20] sm:$0xff pattern:$0x73625140]
      %1599 = vst [vmem:[#allocation1] ss:$4 sm:$0xff] %v1514
      %1600 = vst [vmem:[%s1523] ss:$4 sm:$0xff] %v1515
      %1601 = vst [vmem:[%s1525] ss:$4 sm:$0xff] %v1516
      %1602 = vst [vmem:[%s1527] ss:$4 sm:$0xff] %v1517
      %1603 = vst [vmem:[%s1529] ss:$4 sm:$0xff] %v1518
      %1604 = vst [vmem:[%s1531] ss:$4 sm:$0xff] %v1519
      %1605 = vst [vmem:[%s1533] ss:$4 sm:$0xff] %v1520
      %1606 = vst [vmem:[%s1535] ss:$4 sm:$0xff] %v1521
      %v1607 = vld.sshfl [vmem:[#allocation1] sm:$0xff pattern:$0x73625140]
      %v1608 = vld.sshfl [vmem:[#allocation1 + $0x20] sm:$0xff pattern:$0x73625140]
      %v1625 = vadd.f32 %v1166, %v1537
      %v1626 = vadd.f32 %v1169, %v1538
      %v1627 = vadd.f32 %v1172, %v1547
      %v1628 = vadd.f32 %v1175, %v1548
      %v1629 = vadd.f32 %v1178, %v1557
      %v1630 = vadd.f32 %v1181, %v1558
      %v1631 = vadd.f32 %v1184, %v1567
      %v1632 = vadd.f32 %v1187, %v1568
      %v1633 = vadd.f32 %v1190, %v1577
      %v1634 = vadd.f32 %v1193, %v1578
      %v1635 = vadd.f32 %v1196, %v1587
      %v1636 = vadd.f32 %v1199, %v1588
      %v1637 = vadd.f32 %v1202, %v1597
      %v1638 = vadd.f32 %v1205, %v1598
      %v1639 = vadd.f32 %v1208, %v1607
      %v1640 = vadd.f32 %v1211, %v1608
      %v1641 = vld [vmem:[%s4] sm:$0x1]
      %v1643 = vperm.slane %v1641, 0
      %v1645 = vadd.f32 %v1625, %v1643
      %v1646 = vadd.f32 %v1626, %v1643
      %v1647 = vadd.f32 %v1627, %v1643
      %v1648 = vadd.f32 %v1628, %v1643
      %v1649 = vadd.f32 %v1629, %v1643
      %v1650 = vadd.f32 %v1630, %v1643
      %v1651 = vadd.f32 %v1631, %v1643
      %v1652 = vadd.f32 %v1632, %v1643
      %v1653 = vadd.f32 %v1633, %v1643
      %v1654 = vadd.f32 %v1634, %v1643
      %v1655 = vadd.f32 %v1635, %v1643
      %v1656 = vadd.f32 %v1636, %v1643
      %v1657 = vadd.f32 %v1637, %v1643
      %v1658 = vadd.f32 %v1638, %v1643
      %v1659 = vadd.f32 %v1639, %v1643
      %v1660 = vadd.f32 %v1640, %v1643
      %1661 = vst.msk [vmem:[%s296] sm:$0xff] %vm973, %v1645
      %1662 = vst.msk [vmem:[%s296 + $0x8] sm:$0xff] %vm973, %v1646
      %1663 = vst.msk [vmem:[%s296 + $0x10] sm:$0xff] %vm973, %v1647
      %1664 = vst.msk [vmem:[%s296 + $0x18] sm:$0xff] %vm973, %v1648
      %1665 = vst.msk [vmem:[%s296 + $0x20] sm:$0xff] %vm973, %v1649
      %1666 = vst.msk [vmem:[%s296 + $0x28] sm:$0xff] %vm973, %v1650
      %1667 = vst.msk [vmem:[%s296 + $0x30] sm:$0xff] %vm973, %v1651
      %1668 = vst.msk [vmem:[%s296 + $0x38] sm:$0xff] %vm973, %v1652
      %1669 = vst.msk [vmem:[%s296 + $0x40] sm:$0xff] %vm973, %v1653
      %1670 = vst.msk [vmem:[%s296 + $0x48] sm:$0xff] %vm973, %v1654
      %1671 = vst.msk [vmem:[%s296 + $0x50] sm:$0xff] %vm973, %v1655
      %1672 = vst.msk [vmem:[%s296 + $0x58] sm:$0xff] %vm973, %v1656
      %1673 = vst.msk [vmem:[%s296 + $0x60] sm:$0xff] %vm973, %v1657
      %1674 = vst.msk [vmem:[%s296 + $0x68] sm:$0xff] %vm973, %v1658
      %1675 = vst.msk [vmem:[%s296 + $0x70] sm:$0xff] %vm973, %v1659
      %1676 = vst.msk [vmem:[%s296 + $0x78] sm:$0xff] %vm973, %v1660
      %s1677 = smul.u32 8, %s21
      %p1678 = scmp.lt.s32.totalorder %s20, 1
      %s1679 = scalar_select %p1678, %s20, 1
      %p1680 = scmp.lt.s32.totalorder %s1677, 15
      %s1681 = scalar_select %p1680, %s1677, 15
      %s1682 = smul.addr %s1681, 2
      %s1683 = smul.addr %s1679, 32
      %s1684 = sadd.s32 %s1682, %s1683
      %s1685 = smul.addr %s1684, 8
      %s1686 = scalar_lea.vmem %s5, %s1685
      // Predicated region
      $region41: #{tpu_custom_call.1} parent=39 // pred_check
        %p1687 = pneg %p171
      $region42: #{tpu_custom_call.1} parent=39 // pred_check_branch
        %1689 = sbr.rel (%p1687) target = $region44
      $region43: #{tpu_custom_call.1} parent=39 // pred_region
        %s1690 = smul.u32 8, %s21
      $region44: #{tpu_custom_call.1} parent=39 // pred_fallthru
        _
    $region40: #{tpu_custom_call.1} parent=5 // pred_fallthru
      _
    %p1691 = scmp.le.s32.totalorder 2, %s11
    // Predicated region
    $region45: #{tpu_custom_call.1} parent=5 // pred_check
      %p1692 = pneg %p1691
    $region46: #{tpu_custom_call.1} parent=5 // pred_check_branch
      %1694 = sbr.rel (%p1692) target = $region48
    $region47: #{tpu_custom_call.1} parent=5 // pred_region
      %s1695 = ssub.s32 %s11, 2
      // Predicated region
      $region49: #{tpu_custom_call.1} parent=47 // pred_check
        %p1696 = pneg %p177
      $region50: #{tpu_custom_call.1} parent=47 // pred_check_branch
        %1698 = sbr.rel (%p1696) target = $region52
      $region51: #{tpu_custom_call.1} parent=47 // pred_region
        %s1699 = smul.u32 8, %s23
        %p1700 = scmp.lt.s32.totalorder %s22, 1
        %s1701 = scalar_select %p1700, %s22, 1
        %p1702 = scmp.lt.s32.totalorder %s1699, 15
        %s1703 = scalar_select %p1702, %s1699, 15
        %s1704 = smul.addr %s1703, 2
        %s1705 = smul.addr %s1701, 32
        %s1706 = sadd.s32 %s1704, %s1705
        %s1707 = smul.addr %s1706, 8
        %s1708 = scalar_lea.vmem %s5, %s1707
      $region52: #{tpu_custom_call.1} parent=47 // pred_fallthru
        _
    $region48: #{tpu_custom_call.1} parent=5 // pred_fallthru
      _
  $region6: #{tpu_custom_call.1} parent=0 // loop_footer
    %s15 = sadd.s32 1, %s11
  $region7: #{tpu_custom_call.1} parent=0 // loop_footer_branch
    %10 = sbr.rel target = $region3
  $region8: #{tpu_custom_call.1} parent=0 // loop_exit
    _

</llo_original>
